<compile_context>
chip_gen: v6e
topology: v6e:2x2x1
jax: 0.10.0
libtpu: 0.0.40
codegen_flags: <defaults>
</compile_context>

<pallas_src>
import jax
import jax.numpy as jnp
import numpy as np
from jax.experimental import pallas as pl
from jax.experimental.pallas import tpu as pltpu

D_REAL = 100    # d_model of the torch module (args.d must be 100)
D_PAD = 128     # padded lane width
FF = 2048       # nn.TransformerEncoderLayer default dim_feedforward
NUM_RECS = 100  # rec_emb rows in the module
R_PAD = 128     # padded recommender axis for the lane-dense score matmul
EPS = 1e-5      # LayerNorm default eps
TB_MAX = 128    # max batch rows per grid step


def _rep_spec(shape):
    # Whole-array block replicated across the batch grid (block == array shape
    # satisfies the (8,128) rule; constant index keeps it VMEM-resident).
    nd = len(shape)
    return pl.BlockSpec(shape, lambda i: (0,) * nd)


def _pad2(a, rows, cols, dtype):
    out = jnp.zeros((rows, cols), dtype)
    return out.at[: a.shape[0], : a.shape[1]].set(a.astype(dtype))


def _masked_layernorm(h, mask, gamma, beta):
    # h: (TB, D_PAD) f32 whose pad lanes are exactly zero.  Normalize over the first
    # D_REAL lanes only (divide by 100, not 128); gamma/beta have zero pad lanes, so
    # output pad lanes stay exactly zero.
    h = h * mask
    mu = jnp.sum(h, axis=-1, keepdims=True) * (1.0 / D_REAL)
    c = (h - mu) * mask
    var = jnp.sum(c * c, axis=-1, keepdims=True) * (1.0 / D_REAL)
    return c * jax.lax.rsqrt(var + EPS) * gamma + beta


def mf_fused_kernel(x_ref, wv_ref, bv_ref, wo_ref, bo_ref,
                    g1_ref, be1_ref, w1_ref, b1_ref, w2_ref, b2_ref,
                    g2_ref, be2_ref, rec_t_ref, scores_ref):
    x = x_ref[...]                                    # (TB, 128) f32, pad lanes zero
    lane = jax.lax.broadcasted_iota(jnp.int32, (1, D_PAD), 1)
    mask = (lane < D_REAL).astype(jnp.float32)        # hoisted once per grid step

    # Self-attention over a length-1 sequence == out_proj(v_proj(x)) exactly.
    v = jnp.dot(x.astype(jnp.bfloat16), wv_ref[...],
                preferred_element_type=jnp.float32) + bv_ref[...]
    attn = jnp.dot(v.astype(jnp.bfloat16), wo_ref[...],
                   preferred_element_type=jnp.float32) + bo_ref[...]
    h1 = _masked_layernorm(x + attn, mask, g1_ref[...], be1_ref[...])

    # Feed-forward: ReLU(h1 @ W1 + b1) @ W2 + b2
    ff = jnp.dot(h1.astype(jnp.bfloat16), w1_ref[...],
                 preferred_element_type=jnp.float32) + b1_ref[...]
    ff = jnp.maximum(ff, 0.0)
    ff = jnp.dot(ff.astype(jnp.bfloat16), w2_ref[...],
                 preferred_element_type=jnp.float32) + b2_ref[...]
    h2 = _masked_layernorm(h1 + ff, mask, g2_ref[...], be2_ref[...])

    # Lane-dense score matmul against ALL recommenders: (TB,128) @ (128,128) on the MXU.
    scores_ref[...] = jnp.dot(h2.astype(jnp.bfloat16), rec_t_ref[...],
                              preferred_element_type=jnp.float32)


def make_params(key, num_items):
    ks = jax.random.split(key, 14)
    p = {}

    item = jax.random.normal(ks[0], (num_items, D_REAL), jnp.float32) * (1.0 / D_REAL)
    p["item_emb"] = jnp.pad(item, ((0, 0), (0, D_PAD - D_REAL)))          # (N, 128) f32

    rec = jax.random.normal(ks[1], (NUM_RECS, D_REAL), jnp.float32) * (1.0 / D_REAL)
    rec = rec.astype(jnp.bfloat16).astype(jnp.float32)   # canonical bf16-quantized weights
    p["rec_emb"] = rec                                                    # (100, 100) f32
    p["rec_emb_T"] = _pad2(rec.T, D_PAD, R_PAD, jnp.bfloat16)             # (128, 128) bf16

    p["rec_b"] = jnp.zeros((num_items, 1), jnp.float32)

    def w(k, n_in, n_out, scale, rows, cols):
        return _pad2(jax.random.normal(k, (n_in, n_out), jnp.float32) * scale,
                     rows, cols, jnp.bfloat16)

    p["wv"] = w(ks[2], D_REAL, D_REAL, 1.0 / np.sqrt(D_REAL), D_PAD, D_PAD)
    p["wo"] = w(ks[3], D_REAL, D_REAL, 1.0 / np.sqrt(D_REAL), D_PAD, D_PAD)
    p["w1"] = w(ks[4], D_REAL, FF, np.sqrt(2.0 / (D_REAL + FF)), D_PAD, FF)
    p["w2"] = w(ks[5], FF, D_REAL, np.sqrt(2.0 / (D_REAL + FF)), FF, D_PAD)

    def vec(k, n, scale, cols):
        return _pad2(jax.random.normal(k, (1, n), jnp.float32) * scale, 1, cols, jnp.float32)

    p["bv"] = vec(ks[6], D_REAL, 0.02, D_PAD)
    p["bo"] = vec(ks[7], D_REAL, 0.02, D_PAD)
    p["b1"] = vec(ks[8], FF, 0.02, FF)
    p["b2"] = vec(ks[9], D_REAL, 0.02, D_PAD)
    # LayerNorm affine: pad lanes are zero so padded lanes stay exactly zero post-LN.
    p["g1"] = _pad2(1.0 + 0.05 * jax.random.normal(ks[10], (1, D_REAL), jnp.float32),
                    1, D_PAD, jnp.float32)
    p["be1"] = vec(ks[11], D_REAL, 0.02, D_PAD)
    p["g2"] = _pad2(1.0 + 0.05 * jax.random.normal(ks[12], (1, D_REAL), jnp.float32),
                    1, D_PAD, jnp.float32)
    p["be2"] = vec(ks[13], D_REAL, 0.02, D_PAD)
    return p


def mf_forward(item_seq, rec_to_estimate, params):
    """item_seq: (B, L) int32, rec_to_estimate: (B, R) int32 -> scores (B, R) f32."""
    B, _ = item_seq.shape
    # Batch tiling: one grid step per TB rows (TB <= 128, multiple of 8).
    if B <= TB_MAX:
        tb = max(8, ((B + 7) // 8) * 8)
    else:
        tb = TB_MAX
    b_pad = ((B + tb - 1) // tb) * tb
    grid = (b_pad // tb,)

    # Gather-based sum-pool: touches only B*L rows of the (padded) table.
    x = params["item_emb"][item_seq].sum(axis=1)                          # (B, 128) f32
    if b_pad != B:
        x = jnp.pad(x, ((0, b_pad - B), (0, 0)))

    weights = (params["wv"], params["bv"], params["wo"], params["bo"],
               params["g1"], params["be1"],
               params["w1"], params["b1"], params["w2"], params["b2"],
               params["g2"], params["be2"],
               params["rec_emb_T"])

    scores_all = pl.pallas_call(
        mf_fused_kernel,
        out_shape=jax.ShapeDtypeStruct((b_pad, R_PAD), jnp.float32),
        grid=grid,
        in_specs=[pl.BlockSpec((tb, D_PAD), lambda i: (i, 0))]
                 + [_rep_spec(a.shape) for a in weights],
        out_specs=pl.BlockSpec((tb, R_PAD), lambda i: (i, 0)),
        compiler_params=pltpu.CompilerParams(
            dimension_semantics=("parallel",),
            vmem_limit_bytes=32 * 1024 * 1024),
    )(x, *weights)

    # Gather the requested recommenders' columns + bias (JAX glue).
    dots = jnp.take_along_axis(scores_all[:B, :NUM_RECS], rec_to_estimate, axis=1)
    rec_bias = params["rec_b"][rec_to_estimate][..., 0]
    return dots + rec_bias


def mf_forward_ref(item_seq, rec_to_estimate, p):
    """Pure-JAX f32 reference at the real D=100 (for a correctness check)."""
    f32 = lambda a: a.astype(jnp.float32)
    x = p["item_emb"][item_seq].sum(axis=1)[:, :D_REAL]
    wv = f32(p["wv"])[:D_REAL, :D_REAL]
    wo = f32(p["wo"])[:D_REAL, :D_REAL]
    w1 = f32(p["w1"])[:D_REAL, :]
    w2 = f32(p["w2"])[:, :D_REAL]
    bv, bo, b2 = p["bv"][:, :D_REAL], p["bo"][:, :D_REAL], p["b2"][:, :D_REAL]
    b1 = p["b1"]
    g1, be1 = p["g1"][:, :D_REAL], p["be1"][:, :D_REAL]
    g2, be2 = p["g2"][:, :D_REAL], p["be2"][:, :D_REAL]

    def ln(h, g, b):
        mu = jnp.mean(h, axis=-1, keepdims=True)
        var = jnp.mean((h - mu) ** 2, axis=-1, keepdims=True)
        return (h - mu) * jax.lax.rsqrt(var + EPS) * g + b

    v = x @ wv + bv
    attn = v @ wo + bo
    h1 = ln(x + attn, g1, be1)
    ff = jnp.maximum(h1 @ w1 + b1, 0.0) @ w2 + b2
    h2 = ln(h1 + ff, g2, be2)
    re = p["rec_emb"][rec_to_estimate]                # (B, R, 100)
    rb = p["rec_b"][rec_to_estimate][..., 0]
    return jnp.sum(re * h2[:, None, :], axis=-1) + rb


if __name__ == "__main__":
    key = jax.random.PRNGKey(0)
    k_param, k_seq, k_rec = jax.random.split(key, 3)

    num_items = 128   # item vocabulary (>= NUM_RECS so rec ids are valid for rec_b)
    B, L, R = 8, 8, 4

    params = make_params(k_param, num_items)
    item_seq = jax.random.randint(k_seq, (B, L), 1, num_items, dtype=jnp.int32)
    rec_to_estimate = jax.random.randint(k_rec, (B, R), 0, NUM_RECS, dtype=jnp.int32)

    out = jax.block_until_ready(mf_forward(item_seq, rec_to_estimate, params))
    ref = jax.block_until_ready(mf_forward_ref(item_seq, rec_to_estimate, params))
    np.testing.assert_allclose(np.asarray(out), np.asarray(ref), rtol=3e-2, atol=3e-2)

    print("KERNEL_OK")
</pallas_src>

<mosaic_0001>
module attributes {stable_mosaic.version = 11 : i64} {
  func.func @mf_fused_kernel(%arg0: i32, %arg1: memref<8x128xf32, #tpu.memory_space<vmem>>, %arg2: memref<128x128xbf16, #tpu.memory_space<vmem>>, %arg3: memref<1x128xf32, #tpu.memory_space<vmem>>, %arg4: memref<128x128xbf16, #tpu.memory_space<vmem>>, %arg5: memref<1x128xf32, #tpu.memory_space<vmem>>, %arg6: memref<1x128xf32, #tpu.memory_space<vmem>>, %arg7: memref<1x128xf32, #tpu.memory_space<vmem>>, %arg8: memref<128x2048xbf16, #tpu.memory_space<vmem>>, %arg9: memref<1x2048xf32, #tpu.memory_space<vmem>>, %arg10: memref<2048x128xbf16, #tpu.memory_space<vmem>>, %arg11: memref<1x128xf32, #tpu.memory_space<vmem>>, %arg12: memref<1x128xf32, #tpu.memory_space<vmem>>, %arg13: memref<1x128xf32, #tpu.memory_space<vmem>>, %arg14: memref<128x128xbf16, #tpu.memory_space<vmem>>, %arg15: memref<8x128xf32, #tpu.memory_space<vmem>>) attributes {dimension_semantics = [#tpu.dimension_semantics<parallel>], iteration_bounds = array<i64: 1>, scalar_prefetch = 0 : i64, scratch_operands = 0 : i64, tpu.core_type = #tpu.core_type<tc>, window_params = [{transform_indices = @transform_0, window_bounds = array<i64: 8, 128>}, {pipeline_mode = #tpu.pipeline_mode<synchronous>, transform_indices = @transform_1, window_bounds = array<i64: 128, 128>}, {pipeline_mode = #tpu.pipeline_mode<synchronous>, transform_indices = @transform_2, window_bounds = array<i64: 1, 128>}, {pipeline_mode = #tpu.pipeline_mode<synchronous>, transform_indices = @transform_3, window_bounds = array<i64: 128, 128>}, {pipeline_mode = #tpu.pipeline_mode<synchronous>, transform_indices = @transform_4, window_bounds = array<i64: 1, 128>}, {pipeline_mode = #tpu.pipeline_mode<synchronous>, transform_indices = @transform_5, window_bounds = array<i64: 1, 128>}, {pipeline_mode = #tpu.pipeline_mode<synchronous>, transform_indices = @transform_6, window_bounds = array<i64: 1, 128>}, {pipeline_mode = #tpu.pipeline_mode<synchronous>, transform_indices = @transform_7, window_bounds = array<i64: 128, 2048>}, {pipeline_mode = #tpu.pipeline_mode<synchronous>, transform_indices = @transform_8, window_bounds = array<i64: 1, 2048>}, {pipeline_mode = #tpu.pipeline_mode<synchronous>, transform_indices = @transform_9, window_bounds = array<i64: 2048, 128>}, {pipeline_mode = #tpu.pipeline_mode<synchronous>, transform_indices = @transform_10, window_bounds = array<i64: 1, 128>}, {pipeline_mode = #tpu.pipeline_mode<synchronous>, transform_indices = @transform_11, window_bounds = array<i64: 1, 128>}, {pipeline_mode = #tpu.pipeline_mode<synchronous>, transform_indices = @transform_12, window_bounds = array<i64: 1, 128>}, {pipeline_mode = #tpu.pipeline_mode<synchronous>, transform_indices = @transform_13, window_bounds = array<i64: 128, 128>}, {transform_indices = @transform_14, window_bounds = array<i64: 8, 128>}]} {
    %c0 = arith.constant 0 : index
    %c0_0 = arith.constant 0 : index
    %0 = vector.load %arg1[%c0, %c0_0] : memref<8x128xf32, #tpu.memory_space<vmem>>, vector<8x128xf32>
    %1 = tpu.iota {dimensions = array<i32: 1>} : vector<1x128xi32>
    %c100_i32 = arith.constant 100 : i32
    %2 = vector.broadcast %c100_i32 : i32 to vector<1x128xi32>
    %3 = arith.cmpi slt, %1, %2 : vector<1x128xi32>
    %4 = arith.extui %3 : vector<1x128xi1> to vector<1x128xi32>
    %5 = arith.sitofp %4 : vector<1x128xi32> to vector<1x128xf32>
    %6 = arith.truncf %0 : vector<8x128xf32> to vector<8x128xbf16>
    %c0_1 = arith.constant 0 : index
    %c0_2 = arith.constant 0 : index
    %7 = vector.load %arg2[%c0_1, %c0_2] : memref<128x128xbf16, #tpu.memory_space<vmem>>, vector<128x128xbf16>
    %cst = arith.constant dense<0.000000e+00> : vector<8x128xf32>
    %8 = tpu.matmul %6, %7, %cst {dimension_numbers = #tpu.dot_dimension_numbers<[1], [0], [0], [1], [0, 0, 1, 1], [], []>} : vector<8x128xbf16>, vector<128x128xbf16>, vector<8x128xf32> -> vector<8x128xf32>
    %c0_3 = arith.constant 0 : index
    %c0_4 = arith.constant 0 : index
    %9 = vector.load %arg3[%c0_3, %c0_4] : memref<1x128xf32, #tpu.memory_space<vmem>>, vector<1x128xf32>
    %10 = vector.broadcast %9 : vector<1x128xf32> to vector<8x128xf32>
    %11 = arith.addf %8, %10 : vector<8x128xf32>
    %12 = arith.truncf %11 : vector<8x128xf32> to vector<8x128xbf16>
    %c0_5 = arith.constant 0 : index
    %c0_6 = arith.constant 0 : index
    %13 = vector.load %arg4[%c0_5, %c0_6] : memref<128x128xbf16, #tpu.memory_space<vmem>>, vector<128x128xbf16>
    %cst_7 = arith.constant dense<0.000000e+00> : vector<8x128xf32>
    %14 = tpu.matmul %12, %13, %cst_7 {dimension_numbers = #tpu.dot_dimension_numbers<[1], [0], [0], [1], [0, 0, 1, 1], [], []>} : vector<8x128xbf16>, vector<128x128xbf16>, vector<8x128xf32> -> vector<8x128xf32>
    %c0_8 = arith.constant 0 : index
    %c0_9 = arith.constant 0 : index
    %15 = vector.load %arg5[%c0_8, %c0_9] : memref<1x128xf32, #tpu.memory_space<vmem>>, vector<1x128xf32>
    %16 = vector.broadcast %15 : vector<1x128xf32> to vector<8x128xf32>
    %17 = arith.addf %14, %16 : vector<8x128xf32>
    %18 = arith.addf %0, %17 : vector<8x128xf32>
    %c0_10 = arith.constant 0 : index
    %c0_11 = arith.constant 0 : index
    %19 = vector.load %arg6[%c0_10, %c0_11] : memref<1x128xf32, #tpu.memory_space<vmem>>, vector<1x128xf32>
    %c0_12 = arith.constant 0 : index
    %c0_13 = arith.constant 0 : index
    %20 = vector.load %arg7[%c0_12, %c0_13] : memref<1x128xf32, #tpu.memory_space<vmem>>, vector<1x128xf32>
    %21 = vector.broadcast %5 : vector<1x128xf32> to vector<8x128xf32>
    %22 = arith.mulf %18, %21 : vector<8x128xf32>
    %cst_14 = arith.constant dense<0.000000e+00> : vector<8xf32>
    %23 = vector.multi_reduction <add>, %22, %cst_14 [1] : vector<8x128xf32> to vector<8xf32>
    %24 = vector.shape_cast %23 : vector<8xf32> to vector<8x1xf32>
    %cst_15 = arith.constant 0.00999999977 : f32
    %25 = vector.broadcast %cst_15 : f32 to vector<8x1xf32>
    %26 = arith.mulf %24, %25 : vector<8x1xf32>
    %27 = vector.broadcast %26 : vector<8x1xf32> to vector<8x128xf32>
    %28 = arith.subf %22, %27 : vector<8x128xf32>
    %29 = vector.broadcast %5 : vector<1x128xf32> to vector<8x128xf32>
    %30 = arith.mulf %28, %29 : vector<8x128xf32>
    %31 = arith.mulf %30, %30 : vector<8x128xf32>
    %cst_16 = arith.constant dense<0.000000e+00> : vector<8xf32>
    %32 = vector.multi_reduction <add>, %31, %cst_16 [1] : vector<8x128xf32> to vector<8xf32>
    %33 = vector.shape_cast %32 : vector<8xf32> to vector<8x1xf32>
    %cst_17 = arith.constant 0.00999999977 : f32
    %34 = vector.broadcast %cst_17 : f32 to vector<8x1xf32>
    %35 = arith.mulf %33, %34 : vector<8x1xf32>
    %cst_18 = arith.constant 9.99999974E-6 : f32
    %36 = vector.broadcast %cst_18 : f32 to vector<8x1xf32>
    %37 = arith.addf %35, %36 : vector<8x1xf32>
    %38 = math.rsqrt %37 : vector<8x1xf32>
    %39 = vector.broadcast %38 : vector<8x1xf32> to vector<8x128xf32>
    %40 = arith.mulf %30, %39 : vector<8x128xf32>
    %41 = vector.broadcast %19 : vector<1x128xf32> to vector<8x128xf32>
    %42 = arith.mulf %40, %41 : vector<8x128xf32>
    %43 = vector.broadcast %20 : vector<1x128xf32> to vector<8x128xf32>
    %44 = arith.addf %42, %43 : vector<8x128xf32>
    %45 = arith.truncf %44 : vector<8x128xf32> to vector<8x128xbf16>
    %c0_19 = arith.constant 0 : index
    %c0_20 = arith.constant 0 : index
    %46 = vector.load %arg8[%c0_19, %c0_20] : memref<128x2048xbf16, #tpu.memory_space<vmem>>, vector<128x2048xbf16>
    %cst_21 = arith.constant dense<0.000000e+00> : vector<8x2048xf32>
    %47 = tpu.matmul %45, %46, %cst_21 {dimension_numbers = #tpu.dot_dimension_numbers<[1], [0], [0], [1], [0, 0, 1, 1], [], []>} : vector<8x128xbf16>, vector<128x2048xbf16>, vector<8x2048xf32> -> vector<8x2048xf32>
    %c0_22 = arith.constant 0 : index
    %c0_23 = arith.constant 0 : index
    %48 = vector.load %arg9[%c0_22, %c0_23] : memref<1x2048xf32, #tpu.memory_space<vmem>>, vector<1x2048xf32>
    %49 = vector.broadcast %48 : vector<1x2048xf32> to vector<8x2048xf32>
    %50 = arith.addf %47, %49 : vector<8x2048xf32>
    %cst_24 = arith.constant 0.000000e+00 : f32
    %51 = vector.broadcast %cst_24 : f32 to vector<8x2048xf32>
    %52 = arith.maximumf %50, %51 : vector<8x2048xf32>
    %53 = arith.truncf %52 : vector<8x2048xf32> to vector<8x2048xbf16>
    %c0_25 = arith.constant 0 : index
    %c0_26 = arith.constant 0 : index
    %54 = vector.load %arg10[%c0_25, %c0_26] : memref<2048x128xbf16, #tpu.memory_space<vmem>>, vector<2048x128xbf16>
    %cst_27 = arith.constant dense<0.000000e+00> : vector<8x128xf32>
    %55 = tpu.matmul %53, %54, %cst_27 {dimension_numbers = #tpu.dot_dimension_numbers<[1], [0], [0], [1], [0, 0, 1, 1], [], []>} : vector<8x2048xbf16>, vector<2048x128xbf16>, vector<8x128xf32> -> vector<8x128xf32>
    %c0_28 = arith.constant 0 : index
    %c0_29 = arith.constant 0 : index
    %56 = vector.load %arg11[%c0_28, %c0_29] : memref<1x128xf32, #tpu.memory_space<vmem>>, vector<1x128xf32>
    %57 = vector.broadcast %56 : vector<1x128xf32> to vector<8x128xf32>
    %58 = arith.addf %55, %57 : vector<8x128xf32>
    %59 = arith.addf %44, %58 : vector<8x128xf32>
    %c0_30 = arith.constant 0 : index
    %c0_31 = arith.constant 0 : index
    %60 = vector.load %arg12[%c0_30, %c0_31] : memref<1x128xf32, #tpu.memory_space<vmem>>, vector<1x128xf32>
    %c0_32 = arith.constant 0 : index
    %c0_33 = arith.constant 0 : index
    %61 = vector.load %arg13[%c0_32, %c0_33] : memref<1x128xf32, #tpu.memory_space<vmem>>, vector<1x128xf32>
    %62 = vector.broadcast %5 : vector<1x128xf32> to vector<8x128xf32>
    %63 = arith.mulf %59, %62 : vector<8x128xf32>
    %cst_34 = arith.constant dense<0.000000e+00> : vector<8xf32>
    %64 = vector.multi_reduction <add>, %63, %cst_34 [1] : vector<8x128xf32> to vector<8xf32>
    %65 = vector.shape_cast %64 : vector<8xf32> to vector<8x1xf32>
    %cst_35 = arith.constant 0.00999999977 : f32
    %66 = vector.broadcast %cst_35 : f32 to vector<8x1xf32>
    %67 = arith.mulf %65, %66 : vector<8x1xf32>
    %68 = vector.broadcast %67 : vector<8x1xf32> to vector<8x128xf32>
    %69 = arith.subf %63, %68 : vector<8x128xf32>
    %70 = vector.broadcast %5 : vector<1x128xf32> to vector<8x128xf32>
    %71 = arith.mulf %69, %70 : vector<8x128xf32>
    %72 = arith.mulf %71, %71 : vector<8x128xf32>
    %cst_36 = arith.constant dense<0.000000e+00> : vector<8xf32>
    %73 = vector.multi_reduction <add>, %72, %cst_36 [1] : vector<8x128xf32> to vector<8xf32>
    %74 = vector.shape_cast %73 : vector<8xf32> to vector<8x1xf32>
    %cst_37 = arith.constant 0.00999999977 : f32
    %75 = vector.broadcast %cst_37 : f32 to vector<8x1xf32>
    %76 = arith.mulf %74, %75 : vector<8x1xf32>
    %cst_38 = arith.constant 9.99999974E-6 : f32
    %77 = vector.broadcast %cst_38 : f32 to vector<8x1xf32>
    %78 = arith.addf %76, %77 : vector<8x1xf32>
    %79 = math.rsqrt %78 : vector<8x1xf32>
    %80 = vector.broadcast %79 : vector<8x1xf32> to vector<8x128xf32>
    %81 = arith.mulf %71, %80 : vector<8x128xf32>
    %82 = vector.broadcast %60 : vector<1x128xf32> to vector<8x128xf32>
    %83 = arith.mulf %81, %82 : vector<8x128xf32>
    %84 = vector.broadcast %61 : vector<1x128xf32> to vector<8x128xf32>
    %85 = arith.addf %83, %84 : vector<8x128xf32>
    %86 = arith.truncf %85 : vector<8x128xf32> to vector<8x128xbf16>
    %c0_39 = arith.constant 0 : index
    %c0_40 = arith.constant 0 : index
    %87 = vector.load %arg14[%c0_39, %c0_40] : memref<128x128xbf16, #tpu.memory_space<vmem>>, vector<128x128xbf16>
    %cst_41 = arith.constant dense<0.000000e+00> : vector<8x128xf32>
    %88 = tpu.matmul %86, %87, %cst_41 {dimension_numbers = #tpu.dot_dimension_numbers<[1], [0], [0], [1], [0, 0, 1, 1], [], []>} : vector<8x128xbf16>, vector<128x128xbf16>, vector<8x128xf32> -> vector<8x128xf32>
    %c0_42 = arith.constant 0 : index
    %c0_43 = arith.constant 0 : index
    %89 = vector.load %arg15[%c0_42, %c0_43] : memref<8x128xf32, #tpu.memory_space<vmem>>, vector<8x128xf32>
    tpu.vector_store %arg15[%c0_42, %c0_43], %88 {strides = array<i32>} : memref<8x128xf32, #tpu.memory_space<vmem>>, vector<8x128xf32>,
    return
  }
  func.func @transform_0(%arg0: i32) -> (i32, i32) {
    %c0_i32 = arith.constant 0 : i32
    %c0_i32_0 = arith.constant 0 : i32
    return %arg0, %c0_i32 : i32, i32
  }
  func.func @transform_1(%arg0: i32) -> (i32, i32) {
    %c0_i32 = arith.constant 0 : i32
    %c0_i32_0 = arith.constant 0 : i32
    %c0_i32_1 = arith.constant 0 : i32
    return %c0_i32, %c0_i32_0 : i32, i32
  }
  func.func @transform_2(%arg0: i32) -> (i32, i32) {
    %c0_i32 = arith.constant 0 : i32
    %c0_i32_0 = arith.constant 0 : i32
    %c0_i32_1 = arith.constant 0 : i32
    return %c0_i32, %c0_i32_0 : i32, i32
  }
  func.func @transform_3(%arg0: i32) -> (i32, i32) {
    %c0_i32 = arith.constant 0 : i32
    %c0_i32_0 = arith.constant 0 : i32
    %c0_i32_1 = arith.constant 0 : i32
    return %c0_i32, %c0_i32_0 : i32, i32
  }
  func.func @transform_4(%arg0: i32) -> (i32, i32) {
    %c0_i32 = arith.constant 0 : i32
    %c0_i32_0 = arith.constant 0 : i32
    %c0_i32_1 = arith.constant 0 : i32
    return %c0_i32, %c0_i32_0 : i32, i32
  }
  func.func @transform_5(%arg0: i32) -> (i32, i32) {
    %c0_i32 = arith.constant 0 : i32
    %c0_i32_0 = arith.constant 0 : i32
    %c0_i32_1 = arith.constant 0 : i32
    return %c0_i32, %c0_i32_0 : i32, i32
  }
  func.func @transform_6(%arg0: i32) -> (i32, i32) {
    %c0_i32 = arith.constant 0 : i32
    %c0_i32_0 = arith.constant 0 : i32
    %c0_i32_1 = arith.constant 0 : i32
    return %c0_i32, %c0_i32_0 : i32, i32
  }
  func.func @transform_7(%arg0: i32) -> (i32, i32) {
    %c0_i32 = arith.constant 0 : i32
    %c0_i32_0 = arith.constant 0 : i32
    %c0_i32_1 = arith.constant 0 : i32
    return %c0_i32, %c0_i32_0 : i32, i32
  }
  func.func @transform_8(%arg0: i32) -> (i32, i32) {
    %c0_i32 = arith.constant 0 : i32
    %c0_i32_0 = arith.constant 0 : i32
    %c0_i32_1 = arith.constant 0 : i32
    return %c0_i32, %c0_i32_0 : i32, i32
  }
  func.func @transform_9(%arg0: i32) -> (i32, i32) {
    %c0_i32 = arith.constant 0 : i32
    %c0_i32_0 = arith.constant 0 : i32
    %c0_i32_1 = arith.constant 0 : i32
    return %c0_i32, %c0_i32_0 : i32, i32
  }
  func.func @transform_10(%arg0: i32) -> (i32, i32) {
    %c0_i32 = arith.constant 0 : i32
    %c0_i32_0 = arith.constant 0 : i32
    %c0_i32_1 = arith.constant 0 : i32
    return %c0_i32, %c0_i32_0 : i32, i32
  }
  func.func @transform_11(%arg0: i32) -> (i32, i32) {
    %c0_i32 = arith.constant 0 : i32
    %c0_i32_0 = arith.constant 0 : i32
    %c0_i32_1 = arith.constant 0 : i32
    return %c0_i32, %c0_i32_0 : i32, i32
  }
  func.func @transform_12(%arg0: i32) -> (i32, i32) {
    %c0_i32 = arith.constant 0 : i32
    %c0_i32_0 = arith.constant 0 : i32
    %c0_i32_1 = arith.constant 0 : i32
    return %c0_i32, %c0_i32_0 : i32, i32
  }
  func.func @transform_13(%arg0: i32) -> (i32, i32) {
    %c0_i32 = arith.constant 0 : i32
    %c0_i32_0 = arith.constant 0 : i32
    %c0_i32_1 = arith.constant 0 : i32
    return %c0_i32, %c0_i32_0 : i32, i32
  }
  func.func @transform_14(%arg0: i32) -> (i32, i32) {
    %c0_i32 = arith.constant 0 : i32
    %c0_i32_0 = arith.constant 0 : i32
    return %arg0, %c0_i32 : i32, i32
  }
}

</mosaic_0001>

<llo_original>
// kernel: tpu_custom_call.1
$region0: #{tpu_custom_call.1}
  #allocation0 [shape = 'u32[]', space=smem, size = 0x4, offset = 0x4, fixed_abs, tag = 'smem constant byte address 0x4 - core index']
  #allocation1 [shape = 'u32[144,128]{1,0:T(1,128)}', space=vmem, size = 0x12000, scoped, tag = 'internal scratch']
  %s0 = inlined_call_operand.hbm [shape: f32[8,128], index: 0, kind: input, shape index: {}]
  %s1 = inlined_call_operand.hbm [shape: bf16[128,128], index: 1, kind: input, shape index: {}]
  %s2 = inlined_call_operand.vmem [shape: f32[1,128], index: 2, kind: input, shape index: {}]
  %s3 = inlined_call_operand.hbm [shape: bf16[128,128], index: 3, kind: input, shape index: {}]
  %s4 = inlined_call_operand.vmem [shape: f32[1,128], index: 4, kind: input, shape index: {}]
  %s5 = inlined_call_operand.vmem [shape: f32[1,128], index: 5, kind: input, shape index: {}]
  %s6 = inlined_call_operand.vmem [shape: f32[1,128], index: 6, kind: input, shape index: {}]
  %s7 = inlined_call_operand.hbm [shape: bf16[128,2048], index: 7, kind: input, shape index: {}]
  %s8 = inlined_call_operand.hbm [shape: f32[1,2048], index: 8, kind: input, shape index: {}]
  %s9 = inlined_call_operand.hbm [shape: bf16[2048,128], index: 9, kind: input, shape index: {}]
  %s10 = inlined_call_operand.vmem [shape: f32[1,128], index: 10, kind: input, shape index: {}]
  %s11 = inlined_call_operand.vmem [shape: f32[1,128], index: 11, kind: input, shape index: {}]
  %s12 = inlined_call_operand.vmem [shape: f32[1,128], index: 12, kind: input, shape index: {}]
  %s13 = inlined_call_operand.hbm [shape: bf16[128,128], index: 13, kind: input, shape index: {}]
  %s14 = inlined_call_operand.hbm [shape: f32[8,128], index: 14, kind: output, shape index: {}]
  %s15 = sld [smem:[#allocation0]]
  $region94: #{tpu_custom_call.1} parent=0
    _
  %s17 = ssub.s32 1, %s15
  %s18 = scalar_select 0, %s17, %s15
  $region1: #{tpu_custom_call.1} parent=0
    #allocation2 [shape = 'u8[4096]{0}', space=vmem, size = 0x1000, scoped, tag = 'input window, operand 0, single buffered']
    #allocation3 [shape = 's32[1]{0}', space=sflag, size = 0x4, scoped, tag = 'scoped memory for tpu_custom_call.1']
    #allocation4 [shape = 's32[1]{0}', space=sflag, size = 0x4, scoped, tag = 'scoped memory for tpu_custom_call.1']
    #allocation5 [shape = 'u8[32768]{0}', space=vmem, size = 0x8000, scoped, tag = 'input window, operand 1, single buffered']
    #allocation6 [shape = 's32[1]{0}', space=sflag, size = 0x4, scoped, tag = 'scoped memory for tpu_custom_call.1']
    #allocation7 [shape = 'u8[32768]{0}', space=vmem, size = 0x8000, scoped, tag = 'input window, operand 3, single buffered']
    #allocation8 [shape = 'u8[524288]{0}', space=vmem, size = 0x80000, scoped, tag = 'input window, operand 7, single buffered']
    #allocation9 [shape = 's32[1]{0}', space=sflag, size = 0x4, scoped, tag = 'scoped memory for tpu_custom_call.1']
    #allocation10 [shape = 'u8[8192]{0}', space=vmem, size = 0x2000, scoped, tag = 'input window, operand 8, single buffered']
    #allocation11 [shape = 'u8[524288]{0}', space=vmem, size = 0x80000, scoped, tag = 'input window, operand 9, single buffered']
    #allocation12 [shape = 's32[1]{0}', space=sflag, size = 0x4, scoped, tag = 'scoped memory for tpu_custom_call.1']
    #allocation13 [shape = 'u8[32768]{0}', space=vmem, size = 0x8000, scoped, tag = 'input window, operand 13, single buffered']
    #allocation14 [shape = 'u8[4096]{0}', space=vmem, size = 0x1000, scoped, tag = 'output window, operand 0, single buffered']
    %19 = vsyncpa [#allocation3], 0
    %20 = vsyncpa [#allocation6], 0
    %21 = vsyncpa [#allocation9], 0
    %22 = vsyncpa [#allocation12], 0
    %23 = vsyncpa [#allocation4], 0
    // Predicated region
    $region2: #{tpu_custom_call.1} parent=1 // pred_check
      _
    $region3: #{tpu_custom_call.1} parent=1 // pred_check_branch
      %25 = sbr.rel (0) target = $region5
    $region4: #{tpu_custom_call.1} parent=1 // pred_region
      %s27 = ssub.s32 128, 128
      %28 = vsyncadd [#allocation3], %s27
      %s30 = sshll.u32 [#allocation2], 4
      %s31 = int_to_ptr.vmem [resolvable:$true] %s30
      %33 = dma.hbm_to_vmem [thread:$0]  %s0, 128, %s31, [#allocation3]
    $region5: #{tpu_custom_call.1} parent=1 // pred_fallthru
      _
    // Predicated region
    $region6: #{tpu_custom_call.1} parent=1 // pred_check
      _
    $region7: #{tpu_custom_call.1} parent=1 // pred_check_branch
      %35 = sbr.rel (0) target = $region9
    $region8: #{tpu_custom_call.1} parent=1 // pred_region
      %s37 = ssub.s32 1024, 1024
      %38 = vsyncadd [#allocation6], %s37
      %s39 = sshll.u32 [#allocation5], 4
      %s40 = int_to_ptr.vmem [resolvable:$true] %s39
      %45 = dma.hbm_to_vmem [thread:$0]  %s1, 1024, %s40, [#allocation6], 64, 64, 4
    $region9: #{tpu_custom_call.1} parent=1 // pred_fallthru
      _
    // Predicated region
    $region10: #{tpu_custom_call.1} parent=1 // pred_check
      _
    $region11: #{tpu_custom_call.1} parent=1 // pred_check_branch
      %47 = sbr.rel (0) target = $region13
    $region12: #{tpu_custom_call.1} parent=1 // pred_region
      _
    $region13: #{tpu_custom_call.1} parent=1 // pred_fallthru
      _
    // Predicated region
    $region14: #{tpu_custom_call.1} parent=1 // pred_check
      _
    $region15: #{tpu_custom_call.1} parent=1 // pred_check_branch
      %49 = sbr.rel (0) target = $region17
    $region16: #{tpu_custom_call.1} parent=1 // pred_region
      %s51 = ssub.s32 1024, 1024
      %52 = vsyncadd [#allocation6], %s51
      %s53 = sshll.u32 [#allocation7], 4
      %s54 = int_to_ptr.vmem [resolvable:$true] %s53
      %59 = dma.hbm_to_vmem [thread:$0]  %s3, 1024, %s54, [#allocation6], 64, 64, 4
    $region17: #{tpu_custom_call.1} parent=1 // pred_fallthru
      _
    // Predicated region
    $region18: #{tpu_custom_call.1} parent=1 // pred_check
      _
    $region19: #{tpu_custom_call.1} parent=1 // pred_check_branch
      %61 = sbr.rel (0) target = $region21
    $region20: #{tpu_custom_call.1} parent=1 // pred_region
      _
    $region21: #{tpu_custom_call.1} parent=1 // pred_fallthru
      _
    // Predicated region
    $region22: #{tpu_custom_call.1} parent=1 // pred_check
      _
    $region23: #{tpu_custom_call.1} parent=1 // pred_check_branch
      %63 = sbr.rel (0) target = $region25
    $region24: #{tpu_custom_call.1} parent=1 // pred_region
      _
    $region25: #{tpu_custom_call.1} parent=1 // pred_fallthru
      _
    // Predicated region
    $region26: #{tpu_custom_call.1} parent=1 // pred_check
      _
    $region27: #{tpu_custom_call.1} parent=1 // pred_check_branch
      %65 = sbr.rel (0) target = $region29
    $region28: #{tpu_custom_call.1} parent=1 // pred_region
      _
    $region29: #{tpu_custom_call.1} parent=1 // pred_fallthru
      _
    // Predicated region
    $region30: #{tpu_custom_call.1} parent=1 // pred_check
      _
    $region31: #{tpu_custom_call.1} parent=1 // pred_check_branch
      %67 = sbr.rel (0) target = $region33
    $region32: #{tpu_custom_call.1} parent=1 // pred_region
      %s69 = ssub.s32 16384, 16384
      %70 = vsyncadd [#allocation9], %s69
      %s71 = sshll.u32 [#allocation8], 4
      %s72 = int_to_ptr.vmem [resolvable:$true] %s71
      %77 = dma.hbm_to_vmem [thread:$0]  %s7, 16384, %s72, [#allocation9], 1024, 1024, 64
    $region33: #{tpu_custom_call.1} parent=1 // pred_fallthru
      _
    // Predicated region
    $region34: #{tpu_custom_call.1} parent=1 // pred_check
      _
    $region35: #{tpu_custom_call.1} parent=1 // pred_check_branch
      %79 = sbr.rel (0) target = $region37
    $region36: #{tpu_custom_call.1} parent=1 // pred_region
      %s81 = ssub.s32 256, 256
      %82 = vsyncadd [#allocation9], %s81
      %s84 = sshll.u32 [#allocation10], 4
      %s85 = int_to_ptr.vmem [resolvable:$true] %s84
      %87 = dma.hbm_to_vmem [thread:$0]  %s8, 256, %s85, [#allocation9]
    $region37: #{tpu_custom_call.1} parent=1 // pred_fallthru
      _
    // Predicated region
    $region38: #{tpu_custom_call.1} parent=1 // pred_check
      _
    $region39: #{tpu_custom_call.1} parent=1 // pred_check_branch
      %89 = sbr.rel (0) target = $region41
    $region40: #{tpu_custom_call.1} parent=1 // pred_region
      %s91 = ssub.s32 16384, 16384
      %92 = vsyncadd [#allocation12], %s91
      %s93 = sshll.u32 [#allocation11], 4
      %s94 = int_to_ptr.vmem [resolvable:$true] %s93
      %99 = dma.hbm_to_vmem [thread:$0]  %s9, 16384, %s94, [#allocation12], 64, 64, 4
    $region41: #{tpu_custom_call.1} parent=1 // pred_fallthru
      _
    // Predicated region
    $region42: #{tpu_custom_call.1} parent=1 // pred_check
      _
    $region43: #{tpu_custom_call.1} parent=1 // pred_check_branch
      %101 = sbr.rel (0) target = $region45
    $region44: #{tpu_custom_call.1} parent=1 // pred_region
      _
    $region45: #{tpu_custom_call.1} parent=1 // pred_fallthru
      _
    // Predicated region
    $region46: #{tpu_custom_call.1} parent=1 // pred_check
      _
    $region47: #{tpu_custom_call.1} parent=1 // pred_check_branch
      %103 = sbr.rel (0) target = $region49
    $region48: #{tpu_custom_call.1} parent=1 // pred_region
      _
    $region49: #{tpu_custom_call.1} parent=1 // pred_fallthru
      _
    // Predicated region
    $region50: #{tpu_custom_call.1} parent=1 // pred_check
      _
    $region51: #{tpu_custom_call.1} parent=1 // pred_check_branch
      %105 = sbr.rel (0) target = $region53
    $region52: #{tpu_custom_call.1} parent=1 // pred_region
      _
    $region53: #{tpu_custom_call.1} parent=1 // pred_fallthru
      _
    // Predicated region
    $region54: #{tpu_custom_call.1} parent=1 // pred_check
      _
    $region55: #{tpu_custom_call.1} parent=1 // pred_check_branch
      %107 = sbr.rel (0) target = $region57
    $region56: #{tpu_custom_call.1} parent=1 // pred_region
      %s109 = ssub.s32 1024, 1024
      %110 = vsyncadd [#allocation12], %s109
      %s111 = sshll.u32 [#allocation13], 4
      %s112 = int_to_ptr.vmem [resolvable:$true] %s111
      %117 = dma.hbm_to_vmem [thread:$0]  %s13, 1024, %s112, [#allocation12], 64, 64, 4
    $region57: #{tpu_custom_call.1} parent=1 // pred_fallthru
      _
    // Predicated region
    $region58: #{tpu_custom_call.1} parent=1 // pred_check
      _
    $region59: #{tpu_custom_call.1} parent=1 // pred_check_branch
      %119 = sbr.rel (0) target = $region61
    $region60: #{tpu_custom_call.1} parent=1 // pred_region
      %120 = dma.done [#allocation3], 128
    $region61: #{tpu_custom_call.1} parent=1 // pred_fallthru
      _
    // Predicated region
    $region62: #{tpu_custom_call.1} parent=1 // pred_check
      _
    $region63: #{tpu_custom_call.1} parent=1 // pred_check_branch
      %122 = sbr.rel (0) target = $region65
    $region64: #{tpu_custom_call.1} parent=1 // pred_region
      %123 = dma.done [#allocation6], 1024
    $region65: #{tpu_custom_call.1} parent=1 // pred_fallthru
      _
    // Predicated region
    $region66: #{tpu_custom_call.1} parent=1 // pred_check
      _
    $region67: #{tpu_custom_call.1} parent=1 // pred_check_branch
      %125 = sbr.rel (0) target = $region69
    $region68: #{tpu_custom_call.1} parent=1 // pred_region
      %126 = dma.done [#allocation6], 1024
    $region69: #{tpu_custom_call.1} parent=1 // pred_fallthru
      _
    // Predicated region
    $region70: #{tpu_custom_call.1} parent=1 // pred_check
      _
    $region71: #{tpu_custom_call.1} parent=1 // pred_check_branch
      %128 = sbr.rel (0) target = $region73
    $region72: #{tpu_custom_call.1} parent=1 // pred_region
      %129 = dma.done [#allocation9], 16384
    $region73: #{tpu_custom_call.1} parent=1 // pred_fallthru
      _
    // Predicated region
    $region74: #{tpu_custom_call.1} parent=1 // pred_check
      _
    $region75: #{tpu_custom_call.1} parent=1 // pred_check_branch
      %131 = sbr.rel (0) target = $region77
    $region76: #{tpu_custom_call.1} parent=1 // pred_region
      %132 = dma.done [#allocation9], 256
    $region77: #{tpu_custom_call.1} parent=1 // pred_fallthru
      _
    // Predicated region
    $region78: #{tpu_custom_call.1} parent=1 // pred_check
      _
    $region79: #{tpu_custom_call.1} parent=1 // pred_check_branch
      %134 = sbr.rel (0) target = $region81
    $region80: #{tpu_custom_call.1} parent=1 // pred_region
      %135 = dma.done [#allocation12], 16384
    $region81: #{tpu_custom_call.1} parent=1 // pred_fallthru
      _
    // Predicated region
    $region82: #{tpu_custom_call.1} parent=1 // pred_check
      _
    $region83: #{tpu_custom_call.1} parent=1 // pred_check_branch
      %137 = sbr.rel (0) target = $region85
    $region84: #{tpu_custom_call.1} parent=1 // pred_region
      %138 = dma.done [#allocation12], 1024
    $region85: #{tpu_custom_call.1} parent=1 // pred_fallthru
      _
    %v140 = vld [vmem:[#allocation2] sm:$0xff]
    %v141 = vlaneseq
    %v142 = vand.u32 %v141, 127
    %vm143 = vcmp.lt.s32.totalorder %v142, 100
    %v144 = vsel %vm143, 1, 0
    %v145 = vcvt.s32.f32 %v144
    %v146 = vpack.c.bf16 %v140, %v140
    %v147 = vld [vmem:[#allocation5] sm:$0xf]
    %v148 = vld [vmem:[#allocation5 + $0x4] sm:$0xf]
    %v149 = vld [vmem:[#allocation5 + $0x8] sm:$0xf]
    %v150 = vld [vmem:[#allocation5 + $0xc] sm:$0xf]
    %v151 = vld [vmem:[#allocation5 + $0x10] sm:$0xf]
    %v152 = vld [vmem:[#allocation5 + $0x14] sm:$0xf]
    %v153 = vld [vmem:[#allocation5 + $0x18] sm:$0xf]
    %v154 = vld [vmem:[#allocation5 + $0x1c] sm:$0xf]
    %v155 = vld [vmem:[#allocation5 + $0x20] sm:$0xf]
    %v156 = vld [vmem:[#allocation5 + $0x24] sm:$0xf]
    %v157 = vld [vmem:[#allocation5 + $0x28] sm:$0xf]
    %v158 = vld [vmem:[#allocation5 + $0x2c] sm:$0xf]
    %v159 = vld [vmem:[#allocation5 + $0x30] sm:$0xf]
    %v160 = vld [vmem:[#allocation5 + $0x34] sm:$0xf]
    %v161 = vld [vmem:[#allocation5 + $0x38] sm:$0xf]
    %v162 = vld [vmem:[#allocation5 + $0x3c] sm:$0xf]
    %v163 = vld [vmem:[%s2] sm:$0x1]
    %v165 = vlaneseq
    %v166 = vshrl.u32 %v165, 7
    %v167 = vsub.s32 0, %v166
    %v168 = vrot.slane %v163, %v167
    %v186 = vunpack.c.l.b16 %v147
    %v187 = vunpack.c.l.b16 %v148
    %v188 = vunpack.c.l.b16 %v149
    %v189 = vunpack.c.l.b16 %v150
    %v190 = vunpack.c.l.b16 %v151
    %v191 = vunpack.c.l.b16 %v152
    %v192 = vunpack.c.l.b16 %v153
    %v193 = vunpack.c.l.b16 %v154
    %v194 = vunpack.c.l.b16 %v155
    %v195 = vunpack.c.l.b16 %v156
    %v196 = vunpack.c.l.b16 %v157
    %v197 = vunpack.c.l.b16 %v158
    %v198 = vunpack.c.l.b16 %v159
    %v199 = vunpack.c.l.b16 %v160
    %v200 = vunpack.c.l.b16 %v161
    %v201 = vunpack.c.l.b16 %v162
    %v202 = vpack.c.b16 %v187, %v186
    %v203 = vpack.c.b16 %v189, %v188
    %v204 = vpack.c.b16 %v191, %v190
    %v205 = vpack.c.b16 %v193, %v192
    %v206 = vpack.c.b16 %v195, %v194
    %v207 = vpack.c.b16 %v197, %v196
    %v208 = vpack.c.b16 %v199, %v198
    %v209 = vpack.c.b16 %v201, %v200
    %218 = vmatprep.subr.bf16.mxu0 0
    %219 = vmatpush1.bf16.msra.mxu0 %v209
    %220 = vmatprep.subr.bf16.mxu0 0
    %221 = vmatpush1.bf16.msra.mxu0 %v208
    %222 = vmatprep.subr.bf16.mxu0 0
    %223 = vmatpush1.bf16.msra.mxu0 %v207
    %224 = vmatprep.subr.bf16.mxu0 0
    %225 = vmatpush1.bf16.msra.mxu0 %v206
    %226 = vmatprep.subr.bf16.mxu0 0
    %227 = vmatpush1.bf16.msra.mxu0 %v205
    %228 = vmatprep.subr.bf16.mxu0 0
    %229 = vmatpush1.bf16.msra.mxu0 %v204
    %230 = vmatprep.subr.bf16.mxu0 0
    %231 = vmatpush1.bf16.msra.mxu0 %v203
    %232 = vmatprep.subr.bf16.mxu0 0
    %233 = vmatpush1.bf16.msra.mxu0 %v202
    %234 = vmatprep.subr.bf16.mxu0 0
    %235 = vmatpush2.bf16.msra.mxu0 0
    %236 = vmatprep.subr.bf16.mxu0 0
    %237 = vmatpush2.bf16.msra.mxu0 0
    %238 = vmatprep.subr.bf16.mxu0 0
    %239 = vmatpush2.bf16.msra.mxu0 0
    %240 = vmatprep.subr.bf16.mxu0 0
    %241 = vmatpush2.bf16.msra.mxu0 0
    %242 = vmatprep.subr.bf16.mxu0 0
    %243 = vmatpush2.bf16.msra.mxu0 0
    %244 = vmatprep.subr.bf16.mxu0 0
    %245 = vmatpush2.bf16.msra.mxu0 0
    %246 = vmatprep.subr.bf16.mxu0 0
    %247 = vmatpush2.bf16.msra.mxu0 0
    %248 = vmatprep.subr.bf16.mxu0 0
    %249 = vmatpush2.bf16.msra.mxu0 0
    %250 = vmatprep.mubr.bf16.mxu0 0
    %251 = vmatmul.mubr.bf16.gmra.mxu0 %v146
    %v252 = vpop.f32.mrf.mxu0
    %v253 = vadd.f32 %v168, %v252
    %v254 = vpop.f32.mrf.mxu0
    %v255 = vpop.f32.mrf.mxu0
    %v256 = vpop.f32.mrf.mxu0
    %257 = vdwg.mxu0
    %v258 = vpack.c.bf16 %v253, %v253
    %v259 = vld [vmem:[#allocation7] sm:$0xf]
    %v260 = vld [vmem:[#allocation7 + $0x4] sm:$0xf]
    %v261 = vld [vmem:[#allocation7 + $0x8] sm:$0xf]
    %v262 = vld [vmem:[#allocation7 + $0xc] sm:$0xf]
    %v263 = vld [vmem:[#allocation7 + $0x10] sm:$0xf]
    %v264 = vld [vmem:[#allocation7 + $0x14] sm:$0xf]
    %v265 = vld [vmem:[#allocation7 + $0x18] sm:$0xf]
    %v266 = vld [vmem:[#allocation7 + $0x1c] sm:$0xf]
    %v267 = vld [vmem:[#allocation7 + $0x20] sm:$0xf]
    %v268 = vld [vmem:[#allocation7 + $0x24] sm:$0xf]
    %v269 = vld [vmem:[#allocation7 + $0x28] sm:$0xf]
    %v270 = vld [vmem:[#allocation7 + $0x2c] sm:$0xf]
    %v271 = vld [vmem:[#allocation7 + $0x30] sm:$0xf]
    %v272 = vld [vmem:[#allocation7 + $0x34] sm:$0xf]
    %v273 = vld [vmem:[#allocation7 + $0x38] sm:$0xf]
    %v274 = vld [vmem:[#allocation7 + $0x3c] sm:$0xf]
    %v275 = vld [vmem:[%s4] sm:$0x1]
    %v277 = vlaneseq
    %v278 = vshrl.u32 %v277, 7
    %v279 = vsub.s32 0, %v278
    %v280 = vrot.slane %v275, %v279
    %v298 = vunpack.c.l.b16 %v259
    %v299 = vunpack.c.l.b16 %v260
    %v300 = vunpack.c.l.b16 %v261
    %v301 = vunpack.c.l.b16 %v262
    %v302 = vunpack.c.l.b16 %v263
    %v303 = vunpack.c.l.b16 %v264
    %v304 = vunpack.c.l.b16 %v265
    %v305 = vunpack.c.l.b16 %v266
    %v306 = vunpack.c.l.b16 %v267
    %v307 = vunpack.c.l.b16 %v268
    %v308 = vunpack.c.l.b16 %v269
    %v309 = vunpack.c.l.b16 %v270
    %v310 = vunpack.c.l.b16 %v271
    %v311 = vunpack.c.l.b16 %v272
    %v312 = vunpack.c.l.b16 %v273
    %v313 = vunpack.c.l.b16 %v274
    %v314 = vpack.c.b16 %v299, %v298
    %v315 = vpack.c.b16 %v301, %v300
    %v316 = vpack.c.b16 %v303, %v302
    %v317 = vpack.c.b16 %v305, %v304
    %v318 = vpack.c.b16 %v307, %v306
    %v319 = vpack.c.b16 %v309, %v308
    %v320 = vpack.c.b16 %v311, %v310
    %v321 = vpack.c.b16 %v313, %v312
    %330 = vmatprep.subr.bf16.mxu0 0
    %331 = vmatpush1.bf16.msra.mxu0 %v321
    %332 = vmatprep.subr.bf16.mxu0 0
    %333 = vmatpush1.bf16.msra.mxu0 %v320
    %334 = vmatprep.subr.bf16.mxu0 0
    %335 = vmatpush1.bf16.msra.mxu0 %v319
    %336 = vmatprep.subr.bf16.mxu0 0
    %337 = vmatpush1.bf16.msra.mxu0 %v318
    %338 = vmatprep.subr.bf16.mxu0 0
    %339 = vmatpush1.bf16.msra.mxu0 %v317
    %340 = vmatprep.subr.bf16.mxu0 0
    %341 = vmatpush1.bf16.msra.mxu0 %v316
    %342 = vmatprep.subr.bf16.mxu0 0
    %343 = vmatpush1.bf16.msra.mxu0 %v315
    %344 = vmatprep.subr.bf16.mxu0 0
    %345 = vmatpush1.bf16.msra.mxu0 %v314
    %346 = vmatprep.subr.bf16.mxu0 0
    %347 = vmatpush2.bf16.msra.mxu0 0
    %348 = vmatprep.subr.bf16.mxu0 0
    %349 = vmatpush2.bf16.msra.mxu0 0
    %350 = vmatprep.subr.bf16.mxu0 0
    %351 = vmatpush2.bf16.msra.mxu0 0
    %352 = vmatprep.subr.bf16.mxu0 0
    %353 = vmatpush2.bf16.msra.mxu0 0
    %354 = vmatprep.subr.bf16.mxu0 0
    %355 = vmatpush2.bf16.msra.mxu0 0
    %356 = vmatprep.subr.bf16.mxu0 0
    %357 = vmatpush2.bf16.msra.mxu0 0
    %358 = vmatprep.subr.bf16.mxu0 0
    %359 = vmatpush2.bf16.msra.mxu0 0
    %360 = vmatprep.subr.bf16.mxu0 0
    %361 = vmatpush2.bf16.msra.mxu0 0
    %362 = vmatprep.mubr.bf16.mxu0 0
    %363 = vmatmul.mubr.bf16.gmra.mxu0 %v258
    %v364 = vpop.f32.mrf.mxu0
    %v365 = vadd.f32 %v280, %v364
    %v366 = vpop.f32.mrf.mxu0
    %v367 = vpop.f32.mrf.mxu0
    %v368 = vpop.f32.mrf.mxu0
    %369 = vdwg.mxu0
    %v370 = vadd.f32 %v140, %v365
    %v371 = vld [vmem:[%s5] sm:$0x1]
    %v372 = vld [vmem:[%s6] sm:$0x1]
    %v373 = vmul.f32 %v370, %v145
    %374 = vadd.xlane.f32.xlu0 %v373
    %v375 = vpop.xlane.xlu0 %374
    %v376 = vmul.f32 %v375, 0.01
    %v377 = vsub.f32 %v373, %v376
    %v378 = vmul.f32 %v377, %v145
    %v379 = vmul.f32 %v378, %v378
    %380 = vadd.xlane.f32.xlu0 %v379
    %v381 = vpop.xlane.xlu0 %380
    %v382 = vmul.f32 %v381, 0.01
    %v383 = vadd.f32 %v382, 1e-05
    %v384 = vrsqrt.pop %v383
    %v385 = vmul.f32 %v378, %v384
    %v387 = vlaneseq
    %v388 = vshrl.u32 %v387, 7
    %v389 = vsub.s32 0, %v388
    %v390 = vrot.slane %v371, %v389
    %v392 = vmul.f32 %v385, %v390
    %v394 = vlaneseq
    %v395 = vshrl.u32 %v394, 7
    %v396 = vsub.s32 0, %v395
    %v397 = vrot.slane %v372, %v396
    %v399 = vadd.f32 %v392, %v397
    %v400 = vpack.c.bf16 %v399, %v399
    %v401 = vld [vmem:[#allocation8] sm:$0xff]
    %v402 = vld [vmem:[#allocation8 + $0x8] sm:$0xff]
    %v403 = vld [vmem:[#allocation8 + $0x10] sm:$0xff]
    %v404 = vld [vmem:[#allocation8 + $0x18] sm:$0xff]
    %v405 = vld [vmem:[#allocation8 + $0x20] sm:$0xff]
    %v406 = vld [vmem:[#allocation8 + $0x28] sm:$0xff]
    %v407 = vld [vmem:[#allocation8 + $0x30] sm:$0xff]
    %v408 = vld [vmem:[#allocation8 + $0x38] sm:$0xff]
    %v409 = vld [vmem:[#allocation8 + $0x40] sm:$0xff]
    %v410 = vld [vmem:[#allocation8 + $0x48] sm:$0xff]
    %v411 = vld [vmem:[#allocation8 + $0x50] sm:$0xff]
    %v412 = vld [vmem:[#allocation8 + $0x58] sm:$0xff]
    %v413 = vld [vmem:[#allocation8 + $0x60] sm:$0xff]
    %v414 = vld [vmem:[#allocation8 + $0x68] sm:$0xff]
    %v415 = vld [vmem:[#allocation8 + $0x70] sm:$0xff]
    %v416 = vld [vmem:[#allocation8 + $0x78] sm:$0xff]
    %v417 = vld [vmem:[#allocation8 + $0x80] sm:$0xff]
    %v418 = vld [vmem:[#allocation8 + $0x88] sm:$0xff]
    %v419 = vld [vmem:[#allocation8 + $0x90] sm:$0xff]
    %v420 = vld [vmem:[#allocation8 + $0x98] sm:$0xff]
    %v421 = vld [vmem:[#allocation8 + $0xa0] sm:$0xff]
    %v422 = vld [vmem:[#allocation8 + $0xa8] sm:$0xff]
    %v423 = vld [vmem:[#allocation8 + $0xb0] sm:$0xff]
    %v424 = vld [vmem:[#allocation8 + $0xb8] sm:$0xff]
    %v425 = vld [vmem:[#allocation8 + $0xc0] sm:$0xff]
    %v426 = vld [vmem:[#allocation8 + $0xc8] sm:$0xff]
    %v427 = vld [vmem:[#allocation8 + $0xd0] sm:$0xff]
    %v428 = vld [vmem:[#allocation8 + $0xd8] sm:$0xff]
    %v429 = vld [vmem:[#allocation8 + $0xe0] sm:$0xff]
    %v430 = vld [vmem:[#allocation8 + $0xe8] sm:$0xff]
    %v431 = vld [vmem:[#allocation8 + $0xf0] sm:$0xff]
    %v432 = vld [vmem:[#allocation8 + $0xf8] sm:$0xff]
    %v433 = vld [vmem:[#allocation8 + $0x100] sm:$0xff]
    %v434 = vld [vmem:[#allocation8 + $0x108] sm:$0xff]
    %v435 = vld [vmem:[#allocation8 + $0x110] sm:$0xff]
    %v436 = vld [vmem:[#allocation8 + $0x118] sm:$0xff]
    %v437 = vld [vmem:[#allocation8 + $0x120] sm:$0xff]
    %v438 = vld [vmem:[#allocation8 + $0x128] sm:$0xff]
    %v439 = vld [vmem:[#allocation8 + $0x130] sm:$0xff]
    %v440 = vld [vmem:[#allocation8 + $0x138] sm:$0xff]
    %v441 = vld [vmem:[#allocation8 + $0x140] sm:$0xff]
    %v442 = vld [vmem:[#allocation8 + $0x148] sm:$0xff]
    %v443 = vld [vmem:[#allocation8 + $0x150] sm:$0xff]
    %v444 = vld [vmem:[#allocation8 + $0x158] sm:$0xff]
    %v445 = vld [vmem:[#allocation8 + $0x160] sm:$0xff]
    %v446 = vld [vmem:[#allocation8 + $0x168] sm:$0xff]
    %v447 = vld [vmem:[#allocation8 + $0x170] sm:$0xff]
    %v448 = vld [vmem:[#allocation8 + $0x178] sm:$0xff]
    %v449 = vld [vmem:[#allocation8 + $0x180] sm:$0xff]
    %v450 = vld [vmem:[#allocation8 + $0x188] sm:$0xff]
    %v451 = vld [vmem:[#allocation8 + $0x190] sm:$0xff]
    %v452 = vld [vmem:[#allocation8 + $0x198] sm:$0xff]
    %v453 = vld [vmem:[#allocation8 + $0x1a0] sm:$0xff]
    %v454 = vld [vmem:[#allocation8 + $0x1a8] sm:$0xff]
    %v455 = vld [vmem:[#allocation8 + $0x1b0] sm:$0xff]
    %v456 = vld [vmem:[#allocation8 + $0x1b8] sm:$0xff]
    %v457 = vld [vmem:[#allocation8 + $0x1c0] sm:$0xff]
    %v458 = vld [vmem:[#allocation8 + $0x1c8] sm:$0xff]
    %v459 = vld [vmem:[#allocation8 + $0x1d0] sm:$0xff]
    %v460 = vld [vmem:[#allocation8 + $0x1d8] sm:$0xff]
    %v461 = vld [vmem:[#allocation8 + $0x1e0] sm:$0xff]
    %v462 = vld [vmem:[#allocation8 + $0x1e8] sm:$0xff]
    %v463 = vld [vmem:[#allocation8 + $0x1f0] sm:$0xff]
    %v464 = vld [vmem:[#allocation8 + $0x1f8] sm:$0xff]
    %v465 = vld [vmem:[#allocation8 + $0x200] sm:$0xff]
    %v466 = vld [vmem:[#allocation8 + $0x208] sm:$0xff]
    %v467 = vld [vmem:[#allocation8 + $0x210] sm:$0xff]
    %v468 = vld [vmem:[#allocation8 + $0x218] sm:$0xff]
    %v469 = vld [vmem:[#allocation8 + $0x220] sm:$0xff]
    %v470 = vld [vmem:[#allocation8 + $0x228] sm:$0xff]
    %v471 = vld [vmem:[#allocation8 + $0x230] sm:$0xff]
    %v472 = vld [vmem:[#allocation8 + $0x238] sm:$0xff]
    %v473 = vld [vmem:[#allocation8 + $0x240] sm:$0xff]
    %v474 = vld [vmem:[#allocation8 + $0x248] sm:$0xff]
    %v475 = vld [vmem:[#allocation8 + $0x250] sm:$0xff]
    %v476 = vld [vmem:[#allocation8 + $0x258] sm:$0xff]
    %v477 = vld [vmem:[#allocation8 + $0x260] sm:$0xff]
    %v478 = vld [vmem:[#allocation8 + $0x268] sm:$0xff]
    %v479 = vld [vmem:[#allocation8 + $0x270] sm:$0xff]
    %v480 = vld [vmem:[#allocation8 + $0x278] sm:$0xff]
    %v481 = vld [vmem:[#allocation8 + $0x280] sm:$0xff]
    %v482 = vld [vmem:[#allocation8 + $0x288] sm:$0xff]
    %v483 = vld [vmem:[#allocation8 + $0x290] sm:$0xff]
    %v484 = vld [vmem:[#allocation8 + $0x298] sm:$0xff]
    %v485 = vld [vmem:[#allocation8 + $0x2a0] sm:$0xff]
    %v486 = vld [vmem:[#allocation8 + $0x2a8] sm:$0xff]
    %v487 = vld [vmem:[#allocation8 + $0x2b0] sm:$0xff]
    %v488 = vld [vmem:[#allocation8 + $0x2b8] sm:$0xff]
    %v489 = vld [vmem:[#allocation8 + $0x2c0] sm:$0xff]
    %v490 = vld [vmem:[#allocation8 + $0x2c8] sm:$0xff]
    %v491 = vld [vmem:[#allocation8 + $0x2d0] sm:$0xff]
    %v492 = vld [vmem:[#allocation8 + $0x2d8] sm:$0xff]
    %v493 = vld [vmem:[#allocation8 + $0x2e0] sm:$0xff]
    %v494 = vld [vmem:[#allocation8 + $0x2e8] sm:$0xff]
    %v495 = vld [vmem:[#allocation8 + $0x2f0] sm:$0xff]
    %v496 = vld [vmem:[#allocation8 + $0x2f8] sm:$0xff]
    %v497 = vld [vmem:[#allocation8 + $0x300] sm:$0xff]
    %v498 = vld [vmem:[#allocation8 + $0x308] sm:$0xff]
    %v499 = vld [vmem:[#allocation8 + $0x310] sm:$0xff]
    %v500 = vld [vmem:[#allocation8 + $0x318] sm:$0xff]
    %v501 = vld [vmem:[#allocation8 + $0x320] sm:$0xff]
    %v502 = vld [vmem:[#allocation8 + $0x328] sm:$0xff]
    %v503 = vld [vmem:[#allocation8 + $0x330] sm:$0xff]
    %v504 = vld [vmem:[#allocation8 + $0x338] sm:$0xff]
    %v505 = vld [vmem:[#allocation8 + $0x340] sm:$0xff]
    %v506 = vld [vmem:[#allocation8 + $0x348] sm:$0xff]
    %v507 = vld [vmem:[#allocation8 + $0x350] sm:$0xff]
    %v508 = vld [vmem:[#allocation8 + $0x358] sm:$0xff]
    %v509 = vld [vmem:[#allocation8 + $0x360] sm:$0xff]
    %v510 = vld [vmem:[#allocation8 + $0x368] sm:$0xff]
    %v511 = vld [vmem:[#allocation8 + $0x370] sm:$0xff]
    %v512 = vld [vmem:[#allocation8 + $0x378] sm:$0xff]
    %v513 = vld [vmem:[#allocation8 + $0x380] sm:$0xff]
    %v514 = vld [vmem:[#allocation8 + $0x388] sm:$0xff]
    %v515 = vld [vmem:[#allocation8 + $0x390] sm:$0xff]
    %v516 = vld [vmem:[#allocation8 + $0x398] sm:$0xff]
    %v517 = vld [vmem:[#allocation8 + $0x3a0] sm:$0xff]
    %v518 = vld [vmem:[#allocation8 + $0x3a8] sm:$0xff]
    %v519 = vld [vmem:[#allocation8 + $0x3b0] sm:$0xff]
    %v520 = vld [vmem:[#allocation8 + $0x3b8] sm:$0xff]
    %v521 = vld [vmem:[#allocation8 + $0x3c0] sm:$0xff]
    %v522 = vld [vmem:[#allocation8 + $0x3c8] sm:$0xff]
    %v523 = vld [vmem:[#allocation8 + $0x3d0] sm:$0xff]
    %v524 = vld [vmem:[#allocation8 + $0x3d8] sm:$0xff]
    %v525 = vld [vmem:[#allocation8 + $0x3e0] sm:$0xff]
    %v526 = vld [vmem:[#allocation8 + $0x3e8] sm:$0xff]
    %v527 = vld [vmem:[#allocation8 + $0x3f0] sm:$0xff]
    %v528 = vld [vmem:[#allocation8 + $0x3f8] sm:$0xff]
    %v529 = vld [vmem:[#allocation10] sm:$0xff]
    %v530 = vld [vmem:[#allocation10 + $0x8] sm:$0xff]
    %v533 = vlaneseq
    %v534 = vshrl.u32 %v533, 7
    %v535 = vsub.s32 0, %v534
    %v536 = vrot.slane %v529, %v535
    %v537 = vlaneseq
    %v538 = vshrl.u32 %v537, 7
    %v539 = vsub.s32 1, %v538
    %v540 = vrot.slane %v529, %v539
    %v541 = vlaneseq
    %v542 = vshrl.u32 %v541, 7
    %v543 = vsub.s32 2, %v542
    %v544 = vrot.slane %v529, %v543
    %v545 = vlaneseq
    %v546 = vshrl.u32 %v545, 7
    %v547 = vsub.s32 3, %v546
    %v548 = vrot.slane %v529, %v547
    %v549 = vlaneseq
    %v550 = vshrl.u32 %v549, 7
    %v551 = vsub.s32 4, %v550
    %v552 = vrot.slane %v529, %v551
    %v553 = vlaneseq
    %v554 = vshrl.u32 %v553, 7
    %v555 = vsub.s32 5, %v554
    %v556 = vrot.slane %v529, %v555
    %v557 = vlaneseq
    %v558 = vshrl.u32 %v557, 7
    %v559 = vsub.s32 6, %v558
    %v560 = vrot.slane %v529, %v559
    %v561 = vlaneseq
    %v562 = vshrl.u32 %v561, 7
    %v563 = vsub.s32 7, %v562
    %v564 = vrot.slane %v529, %v563
    %v565 = vlaneseq
    %v566 = vshrl.u32 %v565, 7
    %v567 = vsub.s32 0, %v566
    %v568 = vrot.slane %v530, %v567
    %v569 = vlaneseq
    %v570 = vshrl.u32 %v569, 7
    %v571 = vsub.s32 1, %v570
    %v572 = vrot.slane %v530, %v571
    %v573 = vlaneseq
    %v574 = vshrl.u32 %v573, 7
    %v575 = vsub.s32 2, %v574
    %v576 = vrot.slane %v530, %v575
    %v577 = vlaneseq
    %v578 = vshrl.u32 %v577, 7
    %v579 = vsub.s32 3, %v578
    %v580 = vrot.slane %v530, %v579
    %v581 = vlaneseq
    %v582 = vshrl.u32 %v581, 7
    %v583 = vsub.s32 4, %v582
    %v584 = vrot.slane %v530, %v583
    %v585 = vlaneseq
    %v586 = vshrl.u32 %v585, 7
    %v587 = vsub.s32 5, %v586
    %v588 = vrot.slane %v530, %v587
    %v589 = vlaneseq
    %v590 = vshrl.u32 %v589, 7
    %v591 = vsub.s32 6, %v590
    %v592 = vrot.slane %v530, %v591
    %v593 = vlaneseq
    %v594 = vshrl.u32 %v593, 7
    %v595 = vsub.s32 7, %v594
    %v596 = vrot.slane %v530, %v595
    %v741 = vunpack.c.l.b16 %v401
    %v742 = vunpack.c.h.b16 %v401
    %v743 = vunpack.c.l.b16 %v402
    %v744 = vunpack.c.h.b16 %v402
    %v745 = vunpack.c.l.b16 %v403
    %v746 = vunpack.c.h.b16 %v403
    %v747 = vunpack.c.l.b16 %v404
    %v748 = vunpack.c.h.b16 %v404
    %v749 = vunpack.c.l.b16 %v405
    %v750 = vunpack.c.h.b16 %v405
    %v751 = vunpack.c.l.b16 %v406
    %v752 = vunpack.c.h.b16 %v406
    %v753 = vunpack.c.l.b16 %v407
    %v754 = vunpack.c.h.b16 %v407
    %v755 = vunpack.c.l.b16 %v408
    %v756 = vunpack.c.h.b16 %v408
    %v757 = vunpack.c.l.b16 %v409
    %v758 = vunpack.c.h.b16 %v409
    %v759 = vunpack.c.l.b16 %v410
    %v760 = vunpack.c.h.b16 %v410
    %v761 = vunpack.c.l.b16 %v411
    %v762 = vunpack.c.h.b16 %v411
    %v763 = vunpack.c.l.b16 %v412
    %v764 = vunpack.c.h.b16 %v412
    %v765 = vunpack.c.l.b16 %v413
    %v766 = vunpack.c.h.b16 %v413
    %v767 = vunpack.c.l.b16 %v414
    %v768 = vunpack.c.h.b16 %v414
    %v769 = vunpack.c.l.b16 %v415
    %v770 = vunpack.c.h.b16 %v415
    %v771 = vunpack.c.l.b16 %v416
    %v772 = vunpack.c.h.b16 %v416
    %v773 = vunpack.c.l.b16 %v417
    %v774 = vunpack.c.h.b16 %v417
    %v775 = vunpack.c.l.b16 %v418
    %v776 = vunpack.c.h.b16 %v418
    %v777 = vunpack.c.l.b16 %v419
    %v778 = vunpack.c.h.b16 %v419
    %v779 = vunpack.c.l.b16 %v420
    %v780 = vunpack.c.h.b16 %v420
    %v781 = vunpack.c.l.b16 %v421
    %v782 = vunpack.c.h.b16 %v421
    %v783 = vunpack.c.l.b16 %v422
    %v784 = vunpack.c.h.b16 %v422
    %v785 = vunpack.c.l.b16 %v423
    %v786 = vunpack.c.h.b16 %v423
    %v787 = vunpack.c.l.b16 %v424
    %v788 = vunpack.c.h.b16 %v424
    %v789 = vunpack.c.l.b16 %v425
    %v790 = vunpack.c.h.b16 %v425
    %v791 = vunpack.c.l.b16 %v426
    %v792 = vunpack.c.h.b16 %v426
    %v793 = vunpack.c.l.b16 %v427
    %v794 = vunpack.c.h.b16 %v427
    %v795 = vunpack.c.l.b16 %v428
    %v796 = vunpack.c.h.b16 %v428
    %v797 = vunpack.c.l.b16 %v429
    %v798 = vunpack.c.h.b16 %v429
    %v799 = vunpack.c.l.b16 %v430
    %v800 = vunpack.c.h.b16 %v430
    %v801 = vunpack.c.l.b16 %v431
    %v802 = vunpack.c.h.b16 %v431
    %v803 = vunpack.c.l.b16 %v432
    %v804 = vunpack.c.h.b16 %v432
    %v805 = vunpack.c.l.b16 %v433
    %v806 = vunpack.c.h.b16 %v433
    %v807 = vunpack.c.l.b16 %v434
    %v808 = vunpack.c.h.b16 %v434
    %v809 = vunpack.c.l.b16 %v435
    %v810 = vunpack.c.h.b16 %v435
    %v811 = vunpack.c.l.b16 %v436
    %v812 = vunpack.c.h.b16 %v436
    %v813 = vunpack.c.l.b16 %v437
    %v814 = vunpack.c.h.b16 %v437
    %v815 = vunpack.c.l.b16 %v438
    %v816 = vunpack.c.h.b16 %v438
    %v817 = vunpack.c.l.b16 %v439
    %v818 = vunpack.c.h.b16 %v439
    %v819 = vunpack.c.l.b16 %v440
    %v820 = vunpack.c.h.b16 %v440
    %v821 = vunpack.c.l.b16 %v441
    %v822 = vunpack.c.h.b16 %v441
    %v823 = vunpack.c.l.b16 %v442
    %v824 = vunpack.c.h.b16 %v442
    %v825 = vunpack.c.l.b16 %v443
    %v826 = vunpack.c.h.b16 %v443
    %v827 = vunpack.c.l.b16 %v444
    %v828 = vunpack.c.h.b16 %v444
    %v829 = vunpack.c.l.b16 %v445
    %v830 = vunpack.c.h.b16 %v445
    %v831 = vunpack.c.l.b16 %v446
    %v832 = vunpack.c.h.b16 %v446
    %v833 = vunpack.c.l.b16 %v447
    %v834 = vunpack.c.h.b16 %v447
    %v835 = vunpack.c.l.b16 %v448
    %v836 = vunpack.c.h.b16 %v448
    %v837 = vunpack.c.l.b16 %v449
    %v838 = vunpack.c.h.b16 %v449
    %v839 = vunpack.c.l.b16 %v450
    %v840 = vunpack.c.h.b16 %v450
    %v841 = vunpack.c.l.b16 %v451
    %v842 = vunpack.c.h.b16 %v451
    %v843 = vunpack.c.l.b16 %v452
    %v844 = vunpack.c.h.b16 %v452
    %v845 = vunpack.c.l.b16 %v453
    %v846 = vunpack.c.h.b16 %v453
    %v847 = vunpack.c.l.b16 %v454
    %v848 = vunpack.c.h.b16 %v454
    %v849 = vunpack.c.l.b16 %v455
    %v850 = vunpack.c.h.b16 %v455
    %v851 = vunpack.c.l.b16 %v456
    %v852 = vunpack.c.h.b16 %v456
    %v853 = vunpack.c.l.b16 %v457
    %v854 = vunpack.c.h.b16 %v457
    %v855 = vunpack.c.l.b16 %v458
    %v856 = vunpack.c.h.b16 %v458
    %v857 = vunpack.c.l.b16 %v459
    %v858 = vunpack.c.h.b16 %v459
    %v859 = vunpack.c.l.b16 %v460
    %v860 = vunpack.c.h.b16 %v460
    %v861 = vunpack.c.l.b16 %v461
    %v862 = vunpack.c.h.b16 %v461
    %v863 = vunpack.c.l.b16 %v462
    %v864 = vunpack.c.h.b16 %v462
    %v865 = vunpack.c.l.b16 %v463
    %v866 = vunpack.c.h.b16 %v463
    %v867 = vunpack.c.l.b16 %v464
    %v868 = vunpack.c.h.b16 %v464
    %v869 = vunpack.c.l.b16 %v465
    %v870 = vunpack.c.h.b16 %v465
    %v871 = vunpack.c.l.b16 %v466
    %v872 = vunpack.c.h.b16 %v466
    %v873 = vunpack.c.l.b16 %v467
    %v874 = vunpack.c.h.b16 %v467
    %v875 = vunpack.c.l.b16 %v468
    %v876 = vunpack.c.h.b16 %v468
    %v877 = vunpack.c.l.b16 %v469
    %v878 = vunpack.c.h.b16 %v469
    %v879 = vunpack.c.l.b16 %v470
    %v880 = vunpack.c.h.b16 %v470
    %v881 = vunpack.c.l.b16 %v471
    %v882 = vunpack.c.h.b16 %v471
    %v883 = vunpack.c.l.b16 %v472
    %v884 = vunpack.c.h.b16 %v472
    %v885 = vunpack.c.l.b16 %v473
    %v886 = vunpack.c.h.b16 %v473
    %v887 = vunpack.c.l.b16 %v474
    %v888 = vunpack.c.h.b16 %v474
    %v889 = vunpack.c.l.b16 %v475
    %v890 = vunpack.c.h.b16 %v475
    %v891 = vunpack.c.l.b16 %v476
    %v892 = vunpack.c.h.b16 %v476
    %v893 = vunpack.c.l.b16 %v477
    %v894 = vunpack.c.h.b16 %v477
    %v895 = vunpack.c.l.b16 %v478
    %v896 = vunpack.c.h.b16 %v478
    %v897 = vunpack.c.l.b16 %v479
    %v898 = vunpack.c.h.b16 %v479
    %v899 = vunpack.c.l.b16 %v480
    %v900 = vunpack.c.h.b16 %v480
    %v901 = vunpack.c.l.b16 %v481
    %v902 = vunpack.c.h.b16 %v481
    %v903 = vunpack.c.l.b16 %v482
    %v904 = vunpack.c.h.b16 %v482
    %v905 = vunpack.c.l.b16 %v483
    %v906 = vunpack.c.h.b16 %v483
    %v907 = vunpack.c.l.b16 %v484
    %v908 = vunpack.c.h.b16 %v484
    %v909 = vunpack.c.l.b16 %v485
    %v910 = vunpack.c.h.b16 %v485
    %v911 = vunpack.c.l.b16 %v486
    %v912 = vunpack.c.h.b16 %v486
    %v913 = vunpack.c.l.b16 %v487
    %v914 = vunpack.c.h.b16 %v487
    %v915 = vunpack.c.l.b16 %v488
    %v916 = vunpack.c.h.b16 %v488
    %v917 = vunpack.c.l.b16 %v489
    %v918 = vunpack.c.h.b16 %v489
    %v919 = vunpack.c.l.b16 %v490
    %v920 = vunpack.c.h.b16 %v490
    %v921 = vunpack.c.l.b16 %v491
    %v922 = vunpack.c.h.b16 %v491
    %v923 = vunpack.c.l.b16 %v492
    %v924 = vunpack.c.h.b16 %v492
    %v925 = vunpack.c.l.b16 %v493
    %v926 = vunpack.c.h.b16 %v493
    %v927 = vunpack.c.l.b16 %v494
    %v928 = vunpack.c.h.b16 %v494
    %v929 = vunpack.c.l.b16 %v495
    %v930 = vunpack.c.h.b16 %v495
    %v931 = vunpack.c.l.b16 %v496
    %v932 = vunpack.c.h.b16 %v496
    %v933 = vunpack.c.l.b16 %v497
    %v934 = vunpack.c.h.b16 %v497
    %v935 = vunpack.c.l.b16 %v498
    %v936 = vunpack.c.h.b16 %v498
    %v937 = vunpack.c.l.b16 %v499
    %v938 = vunpack.c.h.b16 %v499
    %v939 = vunpack.c.l.b16 %v500
    %v940 = vunpack.c.h.b16 %v500
    %v941 = vunpack.c.l.b16 %v501
    %v942 = vunpack.c.h.b16 %v501
    %v943 = vunpack.c.l.b16 %v502
    %v944 = vunpack.c.h.b16 %v502
    %v945 = vunpack.c.l.b16 %v503
    %v946 = vunpack.c.h.b16 %v503
    %v947 = vunpack.c.l.b16 %v504
    %v948 = vunpack.c.h.b16 %v504
    %v949 = vunpack.c.l.b16 %v505
    %v950 = vunpack.c.h.b16 %v505
    %v951 = vunpack.c.l.b16 %v506
    %v952 = vunpack.c.h.b16 %v506
    %v953 = vunpack.c.l.b16 %v507
    %v954 = vunpack.c.h.b16 %v507
    %v955 = vunpack.c.l.b16 %v508
    %v956 = vunpack.c.h.b16 %v508
    %v957 = vunpack.c.l.b16 %v509
    %v958 = vunpack.c.h.b16 %v509
    %v959 = vunpack.c.l.b16 %v510
    %v960 = vunpack.c.h.b16 %v510
    %v961 = vunpack.c.l.b16 %v511
    %v962 = vunpack.c.h.b16 %v511
    %v963 = vunpack.c.l.b16 %v512
    %v964 = vunpack.c.h.b16 %v512
    %v965 = vunpack.c.l.b16 %v513
    %v966 = vunpack.c.h.b16 %v513
    %v967 = vunpack.c.l.b16 %v514
    %v968 = vunpack.c.h.b16 %v514
    %v969 = vunpack.c.l.b16 %v515
    %v970 = vunpack.c.h.b16 %v515
    %v971 = vunpack.c.l.b16 %v516
    %v972 = vunpack.c.h.b16 %v516
    %v973 = vunpack.c.l.b16 %v517
    %v974 = vunpack.c.h.b16 %v517
    %v975 = vunpack.c.l.b16 %v518
    %v976 = vunpack.c.h.b16 %v518
    %v977 = vunpack.c.l.b16 %v519
    %v978 = vunpack.c.h.b16 %v519
    %v979 = vunpack.c.l.b16 %v520
    %v980 = vunpack.c.h.b16 %v520
    %v981 = vunpack.c.l.b16 %v521
    %v982 = vunpack.c.h.b16 %v521
    %v983 = vunpack.c.l.b16 %v522
    %v984 = vunpack.c.h.b16 %v522
    %v985 = vunpack.c.l.b16 %v523
    %v986 = vunpack.c.h.b16 %v523
    %v987 = vunpack.c.l.b16 %v524
    %v988 = vunpack.c.h.b16 %v524
    %v989 = vunpack.c.l.b16 %v525
    %v990 = vunpack.c.h.b16 %v525
    %v991 = vunpack.c.l.b16 %v526
    %v992 = vunpack.c.h.b16 %v526
    %v993 = vunpack.c.l.b16 %v527
    %v994 = vunpack.c.h.b16 %v527
    %v995 = vunpack.c.l.b16 %v528
    %v996 = vunpack.c.h.b16 %v528
    %v997 = vpack.c.b16 %v757, %v741
    %v998 = vpack.c.b16 %v758, %v742
    %v999 = vpack.c.b16 %v759, %v743
    %v1000 = vpack.c.b16 %v760, %v744
    %v1001 = vpack.c.b16 %v761, %v745
    %v1002 = vpack.c.b16 %v762, %v746
    %v1003 = vpack.c.b16 %v763, %v747
    %v1004 = vpack.c.b16 %v764, %v748
    %v1005 = vpack.c.b16 %v765, %v749
    %v1006 = vpack.c.b16 %v766, %v750
    %v1007 = vpack.c.b16 %v767, %v751
    %v1008 = vpack.c.b16 %v768, %v752
    %v1009 = vpack.c.b16 %v769, %v753
    %v1010 = vpack.c.b16 %v770, %v754
    %v1011 = vpack.c.b16 %v771, %v755
    %v1012 = vpack.c.b16 %v772, %v756
    %v1013 = vpack.c.b16 %v789, %v773
    %v1014 = vpack.c.b16 %v790, %v774
    %v1015 = vpack.c.b16 %v791, %v775
    %v1016 = vpack.c.b16 %v792, %v776
    %v1017 = vpack.c.b16 %v793, %v777
    %v1018 = vpack.c.b16 %v794, %v778
    %v1019 = vpack.c.b16 %v795, %v779
    %v1020 = vpack.c.b16 %v796, %v780
    %v1021 = vpack.c.b16 %v797, %v781
    %v1022 = vpack.c.b16 %v798, %v782
    %v1023 = vpack.c.b16 %v799, %v783
    %v1024 = vpack.c.b16 %v800, %v784
    %v1025 = vpack.c.b16 %v801, %v785
    %v1026 = vpack.c.b16 %v802, %v786
    %v1027 = vpack.c.b16 %v803, %v787
    %v1028 = vpack.c.b16 %v804, %v788
    %v1029 = vpack.c.b16 %v821, %v805
    %v1030 = vpack.c.b16 %v822, %v806
    %v1031 = vpack.c.b16 %v823, %v807
    %v1032 = vpack.c.b16 %v824, %v808
    %v1033 = vpack.c.b16 %v825, %v809
    %v1034 = vpack.c.b16 %v826, %v810
    %v1035 = vpack.c.b16 %v827, %v811
    %v1036 = vpack.c.b16 %v828, %v812
    %v1037 = vpack.c.b16 %v829, %v813
    %v1038 = vpack.c.b16 %v830, %v814
    %v1039 = vpack.c.b16 %v831, %v815
    %v1040 = vpack.c.b16 %v832, %v816
    %v1041 = vpack.c.b16 %v833, %v817
    %v1042 = vpack.c.b16 %v834, %v818
    %v1043 = vpack.c.b16 %v835, %v819
    %v1044 = vpack.c.b16 %v836, %v820
    %v1045 = vpack.c.b16 %v853, %v837
    %v1046 = vpack.c.b16 %v854, %v838
    %v1047 = vpack.c.b16 %v855, %v839
    %v1048 = vpack.c.b16 %v856, %v840
    %v1049 = vpack.c.b16 %v857, %v841
    %v1050 = vpack.c.b16 %v858, %v842
    %v1051 = vpack.c.b16 %v859, %v843
    %v1052 = vpack.c.b16 %v860, %v844
    %v1053 = vpack.c.b16 %v861, %v845
    %v1054 = vpack.c.b16 %v862, %v846
    %v1055 = vpack.c.b16 %v863, %v847
    %v1056 = vpack.c.b16 %v864, %v848
    %v1057 = vpack.c.b16 %v865, %v849
    %v1058 = vpack.c.b16 %v866, %v850
    %v1059 = vpack.c.b16 %v867, %v851
    %v1060 = vpack.c.b16 %v868, %v852
    %v1061 = vpack.c.b16 %v885, %v869
    %v1062 = vpack.c.b16 %v886, %v870
    %v1063 = vpack.c.b16 %v887, %v871
    %v1064 = vpack.c.b16 %v888, %v872
    %v1065 = vpack.c.b16 %v889, %v873
    %v1066 = vpack.c.b16 %v890, %v874
    %v1067 = vpack.c.b16 %v891, %v875
    %v1068 = vpack.c.b16 %v892, %v876
    %v1069 = vpack.c.b16 %v893, %v877
    %v1070 = vpack.c.b16 %v894, %v878
    %v1071 = vpack.c.b16 %v895, %v879
    %v1072 = vpack.c.b16 %v896, %v880
    %v1073 = vpack.c.b16 %v897, %v881
    %v1074 = vpack.c.b16 %v898, %v882
    %v1075 = vpack.c.b16 %v899, %v883
    %v1076 = vpack.c.b16 %v900, %v884
    %v1077 = vpack.c.b16 %v917, %v901
    %v1078 = vpack.c.b16 %v918, %v902
    %v1079 = vpack.c.b16 %v919, %v903
    %v1080 = vpack.c.b16 %v920, %v904
    %v1081 = vpack.c.b16 %v921, %v905
    %v1082 = vpack.c.b16 %v922, %v906
    %v1083 = vpack.c.b16 %v923, %v907
    %v1084 = vpack.c.b16 %v924, %v908
    %v1085 = vpack.c.b16 %v925, %v909
    %v1086 = vpack.c.b16 %v926, %v910
    %v1087 = vpack.c.b16 %v927, %v911
    %v1088 = vpack.c.b16 %v928, %v912
    %v1089 = vpack.c.b16 %v929, %v913
    %v1090 = vpack.c.b16 %v930, %v914
    %v1091 = vpack.c.b16 %v931, %v915
    %v1092 = vpack.c.b16 %v932, %v916
    %v1093 = vpack.c.b16 %v949, %v933
    %v1094 = vpack.c.b16 %v950, %v934
    %v1095 = vpack.c.b16 %v951, %v935
    %v1096 = vpack.c.b16 %v952, %v936
    %v1097 = vpack.c.b16 %v953, %v937
    %v1098 = vpack.c.b16 %v954, %v938
    %v1099 = vpack.c.b16 %v955, %v939
    %v1100 = vpack.c.b16 %v956, %v940
    %v1101 = vpack.c.b16 %v957, %v941
    %v1102 = vpack.c.b16 %v958, %v942
    %v1103 = vpack.c.b16 %v959, %v943
    %v1104 = vpack.c.b16 %v960, %v944
    %v1105 = vpack.c.b16 %v961, %v945
    %v1106 = vpack.c.b16 %v962, %v946
    %v1107 = vpack.c.b16 %v963, %v947
    %v1108 = vpack.c.b16 %v964, %v948
    %v1109 = vpack.c.b16 %v981, %v965
    %v1110 = vpack.c.b16 %v982, %v966
    %v1111 = vpack.c.b16 %v983, %v967
    %v1112 = vpack.c.b16 %v984, %v968
    %v1113 = vpack.c.b16 %v985, %v969
    %v1114 = vpack.c.b16 %v986, %v970
    %v1115 = vpack.c.b16 %v987, %v971
    %v1116 = vpack.c.b16 %v988, %v972
    %v1117 = vpack.c.b16 %v989, %v973
    %v1118 = vpack.c.b16 %v990, %v974
    %v1119 = vpack.c.b16 %v991, %v975
    %v1120 = vpack.c.b16 %v992, %v976
    %v1121 = vpack.c.b16 %v993, %v977
    %v1122 = vpack.c.b16 %v994, %v978
    %v1123 = vpack.c.b16 %v995, %v979
    %v1124 = vpack.c.b16 %v996, %v980
    %1253 = vmatprep.subr.bf16.mxu0 %v1110
    %1254 = vmatpush1.bf16.msra.mxu0 %v1109
    %1255 = vmatprep.subr.bf16.mxu0 %v1094
    %1256 = vmatpush1.bf16.msra.mxu0 %v1093
    %1257 = vmatprep.subr.bf16.mxu0 %v1078
    %1258 = vmatpush1.bf16.msra.mxu0 %v1077
    %1259 = vmatprep.subr.bf16.mxu0 %v1062
    %1260 = vmatpush1.bf16.msra.mxu0 %v1061
    %1261 = vmatprep.subr.bf16.mxu0 %v1046
    %1262 = vmatpush1.bf16.msra.mxu0 %v1045
    %1263 = vmatprep.subr.bf16.mxu0 %v1030
    %1264 = vmatpush1.bf16.msra.mxu0 %v1029
    %1265 = vmatprep.subr.bf16.mxu0 %v1014
    %1266 = vmatpush1.bf16.msra.mxu0 %v1013
    %1267 = vmatprep.subr.bf16.mxu0 %v998
    %1268 = vmatpush1.bf16.msra.mxu0 %v997
    %1269 = vmatprep.subr.bf16.mxu0 0
    %1270 = vmatpush2.bf16.msra.mxu0 0
    %1271 = vmatprep.subr.bf16.mxu0 0
    %1272 = vmatpush2.bf16.msra.mxu0 0
    %1273 = vmatprep.subr.bf16.mxu0 0
    %1274 = vmatpush2.bf16.msra.mxu0 0
    %1275 = vmatprep.subr.bf16.mxu0 0
    %1276 = vmatpush2.bf16.msra.mxu0 0
    %1277 = vmatprep.subr.bf16.mxu0 0
    %1278 = vmatpush2.bf16.msra.mxu0 0
    %1279 = vmatprep.subr.bf16.mxu0 0
    %1280 = vmatpush2.bf16.msra.mxu0 0
    %1281 = vmatprep.subr.bf16.mxu0 0
    %1282 = vmatpush2.bf16.msra.mxu0 0
    %1283 = vmatprep.subr.bf16.mxu0 0
    %1284 = vmatpush2.bf16.msra.mxu0 0
    %1285 = vmatprep.mubr.bf16.mxu0 0
    %1286 = vmatmul.mubr.bf16.gmra.mxu0 %v400
    %v1287 = vpop.f32.mrf.mxu0
    %v1288 = vadd.f32 %v536, %v1287
    %v1289 = vpop.f32.mrf.mxu0
    %v1290 = vadd.f32 %v540, %v1289
    %v1291 = vpop.f32.mrf.mxu0
    %v1292 = vpop.f32.mrf.mxu0
    %1293 = vdwg.mxu0
    %1294 = vmatprep.subr.bf16.mxu0 %v1112
    %1295 = vmatpush1.bf16.msra.mxu0 %v1111
    %1296 = vmatprep.subr.bf16.mxu0 %v1096
    %1297 = vmatpush1.bf16.msra.mxu0 %v1095
    %1298 = vmatprep.subr.bf16.mxu0 %v1080
    %1299 = vmatpush1.bf16.msra.mxu0 %v1079
    %1300 = vmatprep.subr.bf16.mxu0 %v1064
    %1301 = vmatpush1.bf16.msra.mxu0 %v1063
    %1302 = vmatprep.subr.bf16.mxu0 %v1048
    %1303 = vmatpush1.bf16.msra.mxu0 %v1047
    %1304 = vmatprep.subr.bf16.mxu0 %v1032
    %1305 = vmatpush1.bf16.msra.mxu0 %v1031
    %1306 = vmatprep.subr.bf16.mxu0 %v1016
    %1307 = vmatpush1.bf16.msra.mxu0 %v1015
    %1308 = vmatprep.subr.bf16.mxu0 %v1000
    %1309 = vmatpush1.bf16.msra.mxu0 %v999
    %1310 = vmatprep.subr.bf16.mxu0 0
    %1311 = vmatpush2.bf16.msra.mxu0 0
    %1312 = vmatprep.subr.bf16.mxu0 0
    %1313 = vmatpush2.bf16.msra.mxu0 0
    %1314 = vmatprep.subr.bf16.mxu0 0
    %1315 = vmatpush2.bf16.msra.mxu0 0
    %1316 = vmatprep.subr.bf16.mxu0 0
    %1317 = vmatpush2.bf16.msra.mxu0 0
    %1318 = vmatprep.subr.bf16.mxu0 0
    %1319 = vmatpush2.bf16.msra.mxu0 0
    %1320 = vmatprep.subr.bf16.mxu0 0
    %1321 = vmatpush2.bf16.msra.mxu0 0
    %1322 = vmatprep.subr.bf16.mxu0 0
    %1323 = vmatpush2.bf16.msra.mxu0 0
    %1324 = vmatprep.subr.bf16.mxu0 0
    %1325 = vmatpush2.bf16.msra.mxu0 0
    %1326 = vmatprep.mubr.bf16.mxu0 0
    %1327 = vmatmul.mubr.bf16.gmra.mxu0 %v400
    %v1328 = vpop.f32.mrf.mxu0
    %v1329 = vadd.f32 %v544, %v1328
    %v1330 = vpop.f32.mrf.mxu0
    %v1331 = vadd.f32 %v548, %v1330
    %v1332 = vpop.f32.mrf.mxu0
    %v1333 = vpop.f32.mrf.mxu0
    %1334 = vdwg.mxu0
    %1335 = vmatprep.subr.bf16.mxu0 %v1114
    %1336 = vmatpush1.bf16.msra.mxu0 %v1113
    %1337 = vmatprep.subr.bf16.mxu0 %v1098
    %1338 = vmatpush1.bf16.msra.mxu0 %v1097
    %1339 = vmatprep.subr.bf16.mxu0 %v1082
    %1340 = vmatpush1.bf16.msra.mxu0 %v1081
    %1341 = vmatprep.subr.bf16.mxu0 %v1066
    %1342 = vmatpush1.bf16.msra.mxu0 %v1065
    %1343 = vmatprep.subr.bf16.mxu0 %v1050
    %1344 = vmatpush1.bf16.msra.mxu0 %v1049
    %1345 = vmatprep.subr.bf16.mxu0 %v1034
    %1346 = vmatpush1.bf16.msra.mxu0 %v1033
    %1347 = vmatprep.subr.bf16.mxu0 %v1018
    %1348 = vmatpush1.bf16.msra.mxu0 %v1017
    %1349 = vmatprep.subr.bf16.mxu0 %v1002
    %1350 = vmatpush1.bf16.msra.mxu0 %v1001
    %1351 = vmatprep.subr.bf16.mxu0 0
    %1352 = vmatpush2.bf16.msra.mxu0 0
    %1353 = vmatprep.subr.bf16.mxu0 0
    %1354 = vmatpush2.bf16.msra.mxu0 0
    %1355 = vmatprep.subr.bf16.mxu0 0
    %1356 = vmatpush2.bf16.msra.mxu0 0
    %1357 = vmatprep.subr.bf16.mxu0 0
    %1358 = vmatpush2.bf16.msra.mxu0 0
    %1359 = vmatprep.subr.bf16.mxu0 0
    %1360 = vmatpush2.bf16.msra.mxu0 0
    %1361 = vmatprep.subr.bf16.mxu0 0
    %1362 = vmatpush2.bf16.msra.mxu0 0
    %1363 = vmatprep.subr.bf16.mxu0 0
    %1364 = vmatpush2.bf16.msra.mxu0 0
    %1365 = vmatprep.subr.bf16.mxu0 0
    %1366 = vmatpush2.bf16.msra.mxu0 0
    %1367 = vmatprep.mubr.bf16.mxu0 0
    %1368 = vmatmul.mubr.bf16.gmra.mxu0 %v400
    %v1369 = vpop.f32.mrf.mxu0
    %v1370 = vadd.f32 %v552, %v1369
    %v1371 = vpop.f32.mrf.mxu0
    %v1372 = vadd.f32 %v556, %v1371
    %v1373 = vpop.f32.mrf.mxu0
    %v1374 = vpop.f32.mrf.mxu0
    %1375 = vdwg.mxu0
    %1376 = vmatprep.subr.bf16.mxu0 %v1116
    %1377 = vmatpush1.bf16.msra.mxu0 %v1115
    %1378 = vmatprep.subr.bf16.mxu0 %v1100
    %1379 = vmatpush1.bf16.msra.mxu0 %v1099
    %1380 = vmatprep.subr.bf16.mxu0 %v1084
    %1381 = vmatpush1.bf16.msra.mxu0 %v1083
    %1382 = vmatprep.subr.bf16.mxu0 %v1068
    %1383 = vmatpush1.bf16.msra.mxu0 %v1067
    %1384 = vmatprep.subr.bf16.mxu0 %v1052
    %1385 = vmatpush1.bf16.msra.mxu0 %v1051
    %1386 = vmatprep.subr.bf16.mxu0 %v1036
    %1387 = vmatpush1.bf16.msra.mxu0 %v1035
    %1388 = vmatprep.subr.bf16.mxu0 %v1020
    %1389 = vmatpush1.bf16.msra.mxu0 %v1019
    %1390 = vmatprep.subr.bf16.mxu0 %v1004
    %1391 = vmatpush1.bf16.msra.mxu0 %v1003
    %1392 = vmatprep.subr.bf16.mxu0 0
    %1393 = vmatpush2.bf16.msra.mxu0 0
    %1394 = vmatprep.subr.bf16.mxu0 0
    %1395 = vmatpush2.bf16.msra.mxu0 0
    %1396 = vmatprep.subr.bf16.mxu0 0
    %1397 = vmatpush2.bf16.msra.mxu0 0
    %1398 = vmatprep.subr.bf16.mxu0 0
    %1399 = vmatpush2.bf16.msra.mxu0 0
    %1400 = vmatprep.subr.bf16.mxu0 0
    %1401 = vmatpush2.bf16.msra.mxu0 0
    %1402 = vmatprep.subr.bf16.mxu0 0
    %1403 = vmatpush2.bf16.msra.mxu0 0
    %1404 = vmatprep.subr.bf16.mxu0 0
    %1405 = vmatpush2.bf16.msra.mxu0 0
    %1406 = vmatprep.subr.bf16.mxu0 0
    %1407 = vmatpush2.bf16.msra.mxu0 0
    %1408 = vmatprep.mubr.bf16.mxu0 0
    %1409 = vmatmul.mubr.bf16.gmra.mxu0 %v400
    %v1410 = vpop.f32.mrf.mxu0
    %v1411 = vadd.f32 %v560, %v1410
    %v1412 = vpop.f32.mrf.mxu0
    %v1413 = vadd.f32 %v564, %v1412
    %v1414 = vpop.f32.mrf.mxu0
    %v1415 = vpop.f32.mrf.mxu0
    %1416 = vdwg.mxu0
    %1417 = vmatprep.subr.bf16.mxu0 %v1118
    %1418 = vmatpush1.bf16.msra.mxu0 %v1117
    %1419 = vmatprep.subr.bf16.mxu0 %v1102
    %1420 = vmatpush1.bf16.msra.mxu0 %v1101
    %1421 = vmatprep.subr.bf16.mxu0 %v1086
    %1422 = vmatpush1.bf16.msra.mxu0 %v1085
    %1423 = vmatprep.subr.bf16.mxu0 %v1070
    %1424 = vmatpush1.bf16.msra.mxu0 %v1069
    %1425 = vmatprep.subr.bf16.mxu0 %v1054
    %1426 = vmatpush1.bf16.msra.mxu0 %v1053
    %1427 = vmatprep.subr.bf16.mxu0 %v1038
    %1428 = vmatpush1.bf16.msra.mxu0 %v1037
    %1429 = vmatprep.subr.bf16.mxu0 %v1022
    %1430 = vmatpush1.bf16.msra.mxu0 %v1021
    %1431 = vmatprep.subr.bf16.mxu0 %v1006
    %1432 = vmatpush1.bf16.msra.mxu0 %v1005
    %1433 = vmatprep.subr.bf16.mxu0 0
    %1434 = vmatpush2.bf16.msra.mxu0 0
    %1435 = vmatprep.subr.bf16.mxu0 0
    %1436 = vmatpush2.bf16.msra.mxu0 0
    %1437 = vmatprep.subr.bf16.mxu0 0
    %1438 = vmatpush2.bf16.msra.mxu0 0
    %1439 = vmatprep.subr.bf16.mxu0 0
    %1440 = vmatpush2.bf16.msra.mxu0 0
    %1441 = vmatprep.subr.bf16.mxu0 0
    %1442 = vmatpush2.bf16.msra.mxu0 0
    %1443 = vmatprep.subr.bf16.mxu0 0
    %1444 = vmatpush2.bf16.msra.mxu0 0
    %1445 = vmatprep.subr.bf16.mxu0 0
    %1446 = vmatpush2.bf16.msra.mxu0 0
    %1447 = vmatprep.subr.bf16.mxu0 0
    %1448 = vmatpush2.bf16.msra.mxu0 0
    %1449 = vmatprep.mubr.bf16.mxu0 0
    %1450 = vmatmul.mubr.bf16.gmra.mxu0 %v400
    %v1451 = vpop.f32.mrf.mxu0
    %v1452 = vadd.f32 %v568, %v1451
    %v1453 = vpop.f32.mrf.mxu0
    %v1454 = vadd.f32 %v572, %v1453
    %v1455 = vpop.f32.mrf.mxu0
    %v1456 = vpop.f32.mrf.mxu0
    %1457 = vdwg.mxu0
    %1458 = vmatprep.subr.bf16.mxu0 %v1120
    %1459 = vmatpush1.bf16.msra.mxu0 %v1119
    %1460 = vmatprep.subr.bf16.mxu0 %v1104
    %1461 = vmatpush1.bf16.msra.mxu0 %v1103
    %1462 = vmatprep.subr.bf16.mxu0 %v1088
    %1463 = vmatpush1.bf16.msra.mxu0 %v1087
    %1464 = vmatprep.subr.bf16.mxu0 %v1072
    %1465 = vmatpush1.bf16.msra.mxu0 %v1071
    %1466 = vmatprep.subr.bf16.mxu0 %v1056
    %1467 = vmatpush1.bf16.msra.mxu0 %v1055
    %1468 = vmatprep.subr.bf16.mxu0 %v1040
    %1469 = vmatpush1.bf16.msra.mxu0 %v1039
    %1470 = vmatprep.subr.bf16.mxu0 %v1024
    %1471 = vmatpush1.bf16.msra.mxu0 %v1023
    %1472 = vmatprep.subr.bf16.mxu0 %v1008
    %1473 = vmatpush1.bf16.msra.mxu0 %v1007
    %1474 = vmatprep.subr.bf16.mxu0 0
    %1475 = vmatpush2.bf16.msra.mxu0 0
    %1476 = vmatprep.subr.bf16.mxu0 0
    %1477 = vmatpush2.bf16.msra.mxu0 0
    %1478 = vmatprep.subr.bf16.mxu0 0
    %1479 = vmatpush2.bf16.msra.mxu0 0
    %1480 = vmatprep.subr.bf16.mxu0 0
    %1481 = vmatpush2.bf16.msra.mxu0 0
    %1482 = vmatprep.subr.bf16.mxu0 0
    %1483 = vmatpush2.bf16.msra.mxu0 0
    %1484 = vmatprep.subr.bf16.mxu0 0
    %1485 = vmatpush2.bf16.msra.mxu0 0
    %1486 = vmatprep.subr.bf16.mxu0 0
    %1487 = vmatpush2.bf16.msra.mxu0 0
    %1488 = vmatprep.subr.bf16.mxu0 0
    %1489 = vmatpush2.bf16.msra.mxu0 0
    %1490 = vmatprep.mubr.bf16.mxu0 0
    %1491 = vmatmul.mubr.bf16.gmra.mxu0 %v400
    %v1492 = vpop.f32.mrf.mxu0
    %v1493 = vadd.f32 %v576, %v1492
    %v1494 = vpop.f32.mrf.mxu0
    %v1495 = vadd.f32 %v580, %v1494
    %v1496 = vpop.f32.mrf.mxu0
    %v1497 = vpop.f32.mrf.mxu0
    %1498 = vdwg.mxu0
    %1499 = vmatprep.subr.bf16.mxu0 %v1122
    %1500 = vmatpush1.bf16.msra.mxu0 %v1121
    %1501 = vmatprep.subr.bf16.mxu0 %v1106
    %1502 = vmatpush1.bf16.msra.mxu0 %v1105
    %1503 = vmatprep.subr.bf16.mxu0 %v1090
    %1504 = vmatpush1.bf16.msra.mxu0 %v1089
    %1505 = vmatprep.subr.bf16.mxu0 %v1074
    %1506 = vmatpush1.bf16.msra.mxu0 %v1073
    %1507 = vmatprep.subr.bf16.mxu0 %v1058
    %1508 = vmatpush1.bf16.msra.mxu0 %v1057
    %1509 = vmatprep.subr.bf16.mxu0 %v1042
    %1510 = vmatpush1.bf16.msra.mxu0 %v1041
    %1511 = vmatprep.subr.bf16.mxu0 %v1026
    %1512 = vmatpush1.bf16.msra.mxu0 %v1025
    %1513 = vmatprep.subr.bf16.mxu0 %v1010
    %1514 = vmatpush1.bf16.msra.mxu0 %v1009
    %1515 = vmatprep.subr.bf16.mxu0 0
    %1516 = vmatpush2.bf16.msra.mxu0 0
    %1517 = vmatprep.subr.bf16.mxu0 0
    %1518 = vmatpush2.bf16.msra.mxu0 0
    %1519 = vmatprep.subr.bf16.mxu0 0
    %1520 = vmatpush2.bf16.msra.mxu0 0
    %1521 = vmatprep.subr.bf16.mxu0 0
    %1522 = vmatpush2.bf16.msra.mxu0 0
    %1523 = vmatprep.subr.bf16.mxu0 0
    %1524 = vmatpush2.bf16.msra.mxu0 0
    %1525 = vmatprep.subr.bf16.mxu0 0
    %1526 = vmatpush2.bf16.msra.mxu0 0
    %1527 = vmatprep.subr.bf16.mxu0 0
    %1528 = vmatpush2.bf16.msra.mxu0 0
    %1529 = vmatprep.subr.bf16.mxu0 0
    %1530 = vmatpush2.bf16.msra.mxu0 0
    %1531 = vmatprep.mubr.bf16.mxu0 0
    %1532 = vmatmul.mubr.bf16.gmra.mxu0 %v400
    %v1533 = vpop.f32.mrf.mxu0
    %v1534 = vadd.f32 %v584, %v1533
    %v1535 = vpop.f32.mrf.mxu0
    %v1536 = vadd.f32 %v588, %v1535
    %v1537 = vpop.f32.mrf.mxu0
    %v1538 = vpop.f32.mrf.mxu0
    %1539 = vdwg.mxu0
    %1540 = vmatprep.subr.bf16.mxu0 %v1124
    %1541 = vmatpush1.bf16.msra.mxu0 %v1123
    %1542 = vmatprep.subr.bf16.mxu0 %v1108
    %1543 = vmatpush1.bf16.msra.mxu0 %v1107
    %1544 = vmatprep.subr.bf16.mxu0 %v1092
    %1545 = vmatpush1.bf16.msra.mxu0 %v1091
    %1546 = vmatprep.subr.bf16.mxu0 %v1076
    %1547 = vmatpush1.bf16.msra.mxu0 %v1075
    %1548 = vmatprep.subr.bf16.mxu0 %v1060
    %1549 = vmatpush1.bf16.msra.mxu0 %v1059
    %1550 = vmatprep.subr.bf16.mxu0 %v1044
    %1551 = vmatpush1.bf16.msra.mxu0 %v1043
    %1552 = vmatprep.subr.bf16.mxu0 %v1028
    %1553 = vmatpush1.bf16.msra.mxu0 %v1027
    %1554 = vmatprep.subr.bf16.mxu0 %v1012
    %1555 = vmatpush1.bf16.msra.mxu0 %v1011
    %1556 = vmatprep.subr.bf16.mxu0 0
    %1557 = vmatpush2.bf16.msra.mxu0 0
    %1558 = vmatprep.subr.bf16.mxu0 0
    %1559 = vmatpush2.bf16.msra.mxu0 0
    %1560 = vmatprep.subr.bf16.mxu0 0
    %1561 = vmatpush2.bf16.msra.mxu0 0
    %1562 = vmatprep.subr.bf16.mxu0 0
    %1563 = vmatpush2.bf16.msra.mxu0 0
    %1564 = vmatprep.subr.bf16.mxu0 0
    %1565 = vmatpush2.bf16.msra.mxu0 0
    %1566 = vmatprep.subr.bf16.mxu0 0
    %1567 = vmatpush2.bf16.msra.mxu0 0
    %1568 = vmatprep.subr.bf16.mxu0 0
    %1569 = vmatpush2.bf16.msra.mxu0 0
    %1570 = vmatprep.subr.bf16.mxu0 0
    %1571 = vmatpush2.bf16.msra.mxu0 0
    %1572 = vmatprep.mubr.bf16.mxu0 0
    %1573 = vmatmul.mubr.bf16.gmra.mxu0 %v400
    %v1574 = vpop.f32.mrf.mxu0
    %v1575 = vadd.f32 %v592, %v1574
    %v1576 = vpop.f32.mrf.mxu0
    %v1577 = vadd.f32 %v596, %v1576
    %v1578 = vpop.f32.mrf.mxu0
    %v1579 = vpop.f32.mrf.mxu0
    %1580 = vdwg.mxu0
    %v1581 = vmax.f32 %v1288, 0.0
    %v1582 = vmax.f32 %v1290, 0.0
    %v1583 = vmax.f32 %v1329, 0.0
    %v1584 = vmax.f32 %v1331, 0.0
    %v1585 = vmax.f32 %v1370, 0.0
    %v1586 = vmax.f32 %v1372, 0.0
    %v1587 = vmax.f32 %v1411, 0.0
    %v1588 = vmax.f32 %v1413, 0.0
    %v1589 = vmax.f32 %v1452, 0.0
    %v1590 = vmax.f32 %v1454, 0.0
    %v1591 = vmax.f32 %v1493, 0.0
    %v1592 = vmax.f32 %v1495, 0.0
    %v1593 = vmax.f32 %v1534, 0.0
    %v1594 = vmax.f32 %v1536, 0.0
    %v1595 = vmax.f32 %v1575, 0.0
    %v1596 = vmax.f32 %v1577, 0.0
    %v1597 = vpack.c.bf16 %v1581, %v1581
    %v1598 = vpack.c.bf16 %v1582, %v1582
    %v1599 = vpack.c.bf16 %v1583, %v1583
    %v1600 = vpack.c.bf16 %v1584, %v1584
    %v1601 = vpack.c.bf16 %v1585, %v1585
    %v1602 = vpack.c.bf16 %v1586, %v1586
    %v1603 = vpack.c.bf16 %v1587, %v1587
    %v1604 = vpack.c.bf16 %v1588, %v1588
    %v1605 = vpack.c.bf16 %v1589, %v1589
    %v1606 = vpack.c.bf16 %v1590, %v1590
    %v1607 = vpack.c.bf16 %v1591, %v1591
    %v1608 = vpack.c.bf16 %v1592, %v1592
    %v1609 = vpack.c.bf16 %v1593, %v1593
    %v1610 = vpack.c.bf16 %v1594, %v1594
    %v1611 = vpack.c.bf16 %v1595, %v1595
    %v1612 = vpack.c.bf16 %v1596, %v1596
    %v1613 = vld [vmem:[#allocation11] sm:$0xf]
    %v1614 = vld [vmem:[#allocation11 + $0x4] sm:$0xf]
    %v1615 = vld [vmem:[#allocation11 + $0x8] sm:$0xf]
    %v1616 = vld [vmem:[#allocation11 + $0xc] sm:$0xf]
    %v1617 = vld [vmem:[#allocation11 + $0x10] sm:$0xf]
    %v1618 = vld [vmem:[#allocation11 + $0x14] sm:$0xf]
    %v1619 = vld [vmem:[#allocation11 + $0x18] sm:$0xf]
    %v1620 = vld [vmem:[#allocation11 + $0x1c] sm:$0xf]
    %v1621 = vld [vmem:[#allocation11 + $0x20] sm:$0xf]
    %v1622 = vld [vmem:[#allocation11 + $0x24] sm:$0xf]
    %v1623 = vld [vmem:[#allocation11 + $0x28] sm:$0xf]
    %v1624 = vld [vmem:[#allocation11 + $0x2c] sm:$0xf]
    %v1625 = vld [vmem:[#allocation11 + $0x30] sm:$0xf]
    %v1626 = vld [vmem:[#allocation11 + $0x34] sm:$0xf]
    %v1627 = vld [vmem:[#allocation11 + $0x38] sm:$0xf]
    %v1628 = vld [vmem:[#allocation11 + $0x3c] sm:$0xf]
    %v1629 = vld [vmem:[#allocation11 + $0x40] sm:$0xf]
    %v1630 = vld [vmem:[#allocation11 + $0x44] sm:$0xf]
    %v1631 = vld [vmem:[#allocation11 + $0x48] sm:$0xf]
    %v1632 = vld [vmem:[#allocation11 + $0x4c] sm:$0xf]
    %v1633 = vld [vmem:[#allocation11 + $0x50] sm:$0xf]
    %v1634 = vld [vmem:[#allocation11 + $0x54] sm:$0xf]
    %v1635 = vld [vmem:[#allocation11 + $0x58] sm:$0xf]
    %v1636 = vld [vmem:[#allocation11 + $0x5c] sm:$0xf]
    %v1637 = vld [vmem:[#allocation11 + $0x60] sm:$0xf]
    %v1638 = vld [vmem:[#allocation11 + $0x64] sm:$0xf]
    %v1639 = vld [vmem:[#allocation11 + $0x68] sm:$0xf]
    %v1640 = vld [vmem:[#allocation11 + $0x6c] sm:$0xf]
    %v1641 = vld [vmem:[#allocation11 + $0x70] sm:$0xf]
    %v1642 = vld [vmem:[#allocation11 + $0x74] sm:$0xf]
    %v1643 = vld [vmem:[#allocation11 + $0x78] sm:$0xf]
    %v1644 = vld [vmem:[#allocation11 + $0x7c] sm:$0xf]
    %v1645 = vld [vmem:[#allocation11 + $0x80] sm:$0xf]
    %v1646 = vld [vmem:[#allocation11 + $0x84] sm:$0xf]
    %v1647 = vld [vmem:[#allocation11 + $0x88] sm:$0xf]
    %v1648 = vld [vmem:[#allocation11 + $0x8c] sm:$0xf]
    %v1649 = vld [vmem:[#allocation11 + $0x90] sm:$0xf]
    %v1650 = vld [vmem:[#allocation11 + $0x94] sm:$0xf]
    %v1651 = vld [vmem:[#allocation11 + $0x98] sm:$0xf]
    %v1652 = vld [vmem:[#allocation11 + $0x9c] sm:$0xf]
    %v1653 = vld [vmem:[#allocation11 + $0xa0] sm:$0xf]
    %v1654 = vld [vmem:[#allocation11 + $0xa4] sm:$0xf]
    %v1655 = vld [vmem:[#allocation11 + $0xa8] sm:$0xf]
    %v1656 = vld [vmem:[#allocation11 + $0xac] sm:$0xf]
    %v1657 = vld [vmem:[#allocation11 + $0xb0] sm:$0xf]
    %v1658 = vld [vmem:[#allocation11 + $0xb4] sm:$0xf]
    %v1659 = vld [vmem:[#allocation11 + $0xb8] sm:$0xf]
    %v1660 = vld [vmem:[#allocation11 + $0xbc] sm:$0xf]
    %v1661 = vld [vmem:[#allocation11 + $0xc0] sm:$0xf]
    %v1662 = vld [vmem:[#allocation11 + $0xc4] sm:$0xf]
    %v1663 = vld [vmem:[#allocation11 + $0xc8] sm:$0xf]
    %v1664 = vld [vmem:[#allocation11 + $0xcc] sm:$0xf]
    %v1665 = vld [vmem:[#allocation11 + $0xd0] sm:$0xf]
    %v1666 = vld [vmem:[#allocation11 + $0xd4] sm:$0xf]
    %v1667 = vld [vmem:[#allocation11 + $0xd8] sm:$0xf]
    %v1668 = vld [vmem:[#allocation11 + $0xdc] sm:$0xf]
    %v1669 = vld [vmem:[#allocation11 + $0xe0] sm:$0xf]
    %v1670 = vld [vmem:[#allocation11 + $0xe4] sm:$0xf]
    %v1671 = vld [vmem:[#allocation11 + $0xe8] sm:$0xf]
    %v1672 = vld [vmem:[#allocation11 + $0xec] sm:$0xf]
    %v1673 = vld [vmem:[#allocation11 + $0xf0] sm:$0xf]
    %v1674 = vld [vmem:[#allocation11 + $0xf4] sm:$0xf]
    %v1675 = vld [vmem:[#allocation11 + $0xf8] sm:$0xf]
    %v1676 = vld [vmem:[#allocation11 + $0xfc] sm:$0xf]
    %v1677 = vld [vmem:[#allocation11 + $0x100] sm:$0xf]
    %v1678 = vld [vmem:[#allocation11 + $0x104] sm:$0xf]
    %v1679 = vld [vmem:[#allocation11 + $0x108] sm:$0xf]
    %v1680 = vld [vmem:[#allocation11 + $0x10c] sm:$0xf]
    %v1681 = vld [vmem:[#allocation11 + $0x110] sm:$0xf]
    %v1682 = vld [vmem:[#allocation11 + $0x114] sm:$0xf]
    %v1683 = vld [vmem:[#allocation11 + $0x118] sm:$0xf]
    %v1684 = vld [vmem:[#allocation11 + $0x11c] sm:$0xf]
    %v1685 = vld [vmem:[#allocation11 + $0x120] sm:$0xf]
    %v1686 = vld [vmem:[#allocation11 + $0x124] sm:$0xf]
    %v1687 = vld [vmem:[#allocation11 + $0x128] sm:$0xf]
    %v1688 = vld [vmem:[#allocation11 + $0x12c] sm:$0xf]
    %v1689 = vld [vmem:[#allocation11 + $0x130] sm:$0xf]
    %v1690 = vld [vmem:[#allocation11 + $0x134] sm:$0xf]
    %v1691 = vld [vmem:[#allocation11 + $0x138] sm:$0xf]
    %v1692 = vld [vmem:[#allocation11 + $0x13c] sm:$0xf]
    %v1693 = vld [vmem:[#allocation11 + $0x140] sm:$0xf]
    %v1694 = vld [vmem:[#allocation11 + $0x144] sm:$0xf]
    %v1695 = vld [vmem:[#allocation11 + $0x148] sm:$0xf]
    %v1696 = vld [vmem:[#allocation11 + $0x14c] sm:$0xf]
    %v1697 = vld [vmem:[#allocation11 + $0x150] sm:$0xf]
    %v1698 = vld [vmem:[#allocation11 + $0x154] sm:$0xf]
    %v1699 = vld [vmem:[#allocation11 + $0x158] sm:$0xf]
    %v1700 = vld [vmem:[#allocation11 + $0x15c] sm:$0xf]
    %v1701 = vld [vmem:[#allocation11 + $0x160] sm:$0xf]
    %v1702 = vld [vmem:[#allocation11 + $0x164] sm:$0xf]
    %v1703 = vld [vmem:[#allocation11 + $0x168] sm:$0xf]
    %v1704 = vld [vmem:[#allocation11 + $0x16c] sm:$0xf]
    %v1705 = vld [vmem:[#allocation11 + $0x170] sm:$0xf]
    %v1706 = vld [vmem:[#allocation11 + $0x174] sm:$0xf]
    %v1707 = vld [vmem:[#allocation11 + $0x178] sm:$0xf]
    %v1708 = vld [vmem:[#allocation11 + $0x17c] sm:$0xf]
    %v1709 = vld [vmem:[#allocation11 + $0x180] sm:$0xf]
    %v1710 = vld [vmem:[#allocation11 + $0x184] sm:$0xf]
    %v1711 = vld [vmem:[#allocation11 + $0x188] sm:$0xf]
    %v1712 = vld [vmem:[#allocation11 + $0x18c] sm:$0xf]
    %v1713 = vld [vmem:[#allocation11 + $0x190] sm:$0xf]
    %v1714 = vld [vmem:[#allocation11 + $0x194] sm:$0xf]
    %v1715 = vld [vmem:[#allocation11 + $0x198] sm:$0xf]
    %v1716 = vld [vmem:[#allocation11 + $0x19c] sm:$0xf]
    %v1717 = vld [vmem:[#allocation11 + $0x1a0] sm:$0xf]
    %v1718 = vld [vmem:[#allocation11 + $0x1a4] sm:$0xf]
    %v1719 = vld [vmem:[#allocation11 + $0x1a8] sm:$0xf]
    %v1720 = vld [vmem:[#allocation11 + $0x1ac] sm:$0xf]
    %v1721 = vld [vmem:[#allocation11 + $0x1b0] sm:$0xf]
    %v1722 = vld [vmem:[#allocation11 + $0x1b4] sm:$0xf]
    %v1723 = vld [vmem:[#allocation11 + $0x1b8] sm:$0xf]
    %v1724 = vld [vmem:[#allocation11 + $0x1bc] sm:$0xf]
    %v1725 = vld [vmem:[#allocation11 + $0x1c0] sm:$0xf]
    %v1726 = vld [vmem:[#allocation11 + $0x1c4] sm:$0xf]
    %v1727 = vld [vmem:[#allocation11 + $0x1c8] sm:$0xf]
    %v1728 = vld [vmem:[#allocation11 + $0x1cc] sm:$0xf]
    %v1729 = vld [vmem:[#allocation11 + $0x1d0] sm:$0xf]
    %v1730 = vld [vmem:[#allocation11 + $0x1d4] sm:$0xf]
    %v1731 = vld [vmem:[#allocation11 + $0x1d8] sm:$0xf]
    %v1732 = vld [vmem:[#allocation11 + $0x1dc] sm:$0xf]
    %v1733 = vld [vmem:[#allocation11 + $0x1e0] sm:$0xf]
    %v1734 = vld [vmem:[#allocation11 + $0x1e4] sm:$0xf]
    %v1735 = vld [vmem:[#allocation11 + $0x1e8] sm:$0xf]
    %v1736 = vld [vmem:[#allocation11 + $0x1ec] sm:$0xf]
    %v1737 = vld [vmem:[#allocation11 + $0x1f0] sm:$0xf]
    %v1738 = vld [vmem:[#allocation11 + $0x1f4] sm:$0xf]
    %v1739 = vld [vmem:[#allocation11 + $0x1f8] sm:$0xf]
    %v1740 = vld [vmem:[#allocation11 + $0x1fc] sm:$0xf]
    %v1741 = vld [vmem:[#allocation11 + $0x200] sm:$0xf]
    %v1742 = vld [vmem:[#allocation11 + $0x204] sm:$0xf]
    %v1743 = vld [vmem:[#allocation11 + $0x208] sm:$0xf]
    %v1744 = vld [vmem:[#allocation11 + $0x20c] sm:$0xf]
    %v1745 = vld [vmem:[#allocation11 + $0x210] sm:$0xf]
    %v1746 = vld [vmem:[#allocation11 + $0x214] sm:$0xf]
    %v1747 = vld [vmem:[#allocation11 + $0x218] sm:$0xf]
    %v1748 = vld [vmem:[#allocation11 + $0x21c] sm:$0xf]
    %v1749 = vld [vmem:[#allocation11 + $0x220] sm:$0xf]
    %v1750 = vld [vmem:[#allocation11 + $0x224] sm:$0xf]
    %v1751 = vld [vmem:[#allocation11 + $0x228] sm:$0xf]
    %v1752 = vld [vmem:[#allocation11 + $0x22c] sm:$0xf]
    %v1753 = vld [vmem:[#allocation11 + $0x230] sm:$0xf]
    %v1754 = vld [vmem:[#allocation11 + $0x234] sm:$0xf]
    %v1755 = vld [vmem:[#allocation11 + $0x238] sm:$0xf]
    %v1756 = vld [vmem:[#allocation11 + $0x23c] sm:$0xf]
    %v1757 = vld [vmem:[#allocation11 + $0x240] sm:$0xf]
    %v1758 = vld [vmem:[#allocation11 + $0x244] sm:$0xf]
    %v1759 = vld [vmem:[#allocation11 + $0x248] sm:$0xf]
    %v1760 = vld [vmem:[#allocation11 + $0x24c] sm:$0xf]
    %v1761 = vld [vmem:[#allocation11 + $0x250] sm:$0xf]
    %v1762 = vld [vmem:[#allocation11 + $0x254] sm:$0xf]
    %v1763 = vld [vmem:[#allocation11 + $0x258] sm:$0xf]
    %v1764 = vld [vmem:[#allocation11 + $0x25c] sm:$0xf]
    %v1765 = vld [vmem:[#allocation11 + $0x260] sm:$0xf]
    %v1766 = vld [vmem:[#allocation11 + $0x264] sm:$0xf]
    %v1767 = vld [vmem:[#allocation11 + $0x268] sm:$0xf]
    %v1768 = vld [vmem:[#allocation11 + $0x26c] sm:$0xf]
    %v1769 = vld [vmem:[#allocation11 + $0x270] sm:$0xf]
    %v1770 = vld [vmem:[#allocation11 + $0x274] sm:$0xf]
    %v1771 = vld [vmem:[#allocation11 + $0x278] sm:$0xf]
    %v1772 = vld [vmem:[#allocation11 + $0x27c] sm:$0xf]
    %v1773 = vld [vmem:[#allocation11 + $0x280] sm:$0xf]
    %v1774 = vld [vmem:[#allocation11 + $0x284] sm:$0xf]
    %v1775 = vld [vmem:[#allocation11 + $0x288] sm:$0xf]
    %v1776 = vld [vmem:[#allocation11 + $0x28c] sm:$0xf]
    %v1777 = vld [vmem:[#allocation11 + $0x290] sm:$0xf]
    %v1778 = vld [vmem:[#allocation11 + $0x294] sm:$0xf]
    %v1779 = vld [vmem:[#allocation11 + $0x298] sm:$0xf]
    %v1780 = vld [vmem:[#allocation11 + $0x29c] sm:$0xf]
    %v1781 = vld [vmem:[#allocation11 + $0x2a0] sm:$0xf]
    %v1782 = vld [vmem:[#allocation11 + $0x2a4] sm:$0xf]
    %v1783 = vld [vmem:[#allocation11 + $0x2a8] sm:$0xf]
    %v1784 = vld [vmem:[#allocation11 + $0x2ac] sm:$0xf]
    %v1785 = vld [vmem:[#allocation11 + $0x2b0] sm:$0xf]
    %v1786 = vld [vmem:[#allocation11 + $0x2b4] sm:$0xf]
    %v1787 = vld [vmem:[#allocation11 + $0x2b8] sm:$0xf]
    %v1788 = vld [vmem:[#allocation11 + $0x2bc] sm:$0xf]
    %v1789 = vld [vmem:[#allocation11 + $0x2c0] sm:$0xf]
    %v1790 = vld [vmem:[#allocation11 + $0x2c4] sm:$0xf]
    %v1791 = vld [vmem:[#allocation11 + $0x2c8] sm:$0xf]
    %v1792 = vld [vmem:[#allocation11 + $0x2cc] sm:$0xf]
    %v1793 = vld [vmem:[#allocation11 + $0x2d0] sm:$0xf]
    %v1794 = vld [vmem:[#allocation11 + $0x2d4] sm:$0xf]
    %v1795 = vld [vmem:[#allocation11 + $0x2d8] sm:$0xf]
    %v1796 = vld [vmem:[#allocation11 + $0x2dc] sm:$0xf]
    %v1797 = vld [vmem:[#allocation11 + $0x2e0] sm:$0xf]
    %v1798 = vld [vmem:[#allocation11 + $0x2e4] sm:$0xf]
    %v1799 = vld [vmem:[#allocation11 + $0x2e8] sm:$0xf]
    %v1800 = vld [vmem:[#allocation11 + $0x2ec] sm:$0xf]
    %v1801 = vld [vmem:[#allocation11 + $0x2f0] sm:$0xf]
    %v1802 = vld [vmem:[#allocation11 + $0x2f4] sm:$0xf]
    %v1803 = vld [vmem:[#allocation11 + $0x2f8] sm:$0xf]
    %v1804 = vld [vmem:[#allocation11 + $0x2fc] sm:$0xf]
    %v1805 = vld [vmem:[#allocation11 + $0x300] sm:$0xf]
    %v1806 = vld [vmem:[#allocation11 + $0x304] sm:$0xf]
    %v1807 = vld [vmem:[#allocation11 + $0x308] sm:$0xf]
    %v1808 = vld [vmem:[#allocation11 + $0x30c] sm:$0xf]
    %v1809 = vld [vmem:[#allocation11 + $0x310] sm:$0xf]
    %v1810 = vld [vmem:[#allocation11 + $0x314] sm:$0xf]
    %v1811 = vld [vmem:[#allocation11 + $0x318] sm:$0xf]
    %v1812 = vld [vmem:[#allocation11 + $0x31c] sm:$0xf]
    %v1813 = vld [vmem:[#allocation11 + $0x320] sm:$0xf]
    %v1814 = vld [vmem:[#allocation11 + $0x324] sm:$0xf]
    %v1815 = vld [vmem:[#allocation11 + $0x328] sm:$0xf]
    %v1816 = vld [vmem:[#allocation11 + $0x32c] sm:$0xf]
    %v1817 = vld [vmem:[#allocation11 + $0x330] sm:$0xf]
    %v1818 = vld [vmem:[#allocation11 + $0x334] sm:$0xf]
    %v1819 = vld [vmem:[#allocation11 + $0x338] sm:$0xf]
    %v1820 = vld [vmem:[#allocation11 + $0x33c] sm:$0xf]
    %v1821 = vld [vmem:[#allocation11 + $0x340] sm:$0xf]
    %v1822 = vld [vmem:[#allocation11 + $0x344] sm:$0xf]
    %v1823 = vld [vmem:[#allocation11 + $0x348] sm:$0xf]
    %v1824 = vld [vmem:[#allocation11 + $0x34c] sm:$0xf]
    %v1825 = vld [vmem:[#allocation11 + $0x350] sm:$0xf]
    %v1826 = vld [vmem:[#allocation11 + $0x354] sm:$0xf]
    %v1827 = vld [vmem:[#allocation11 + $0x358] sm:$0xf]
    %v1828 = vld [vmem:[#allocation11 + $0x35c] sm:$0xf]
    %v1829 = vld [vmem:[#allocation11 + $0x360] sm:$0xf]
    %v1830 = vld [vmem:[#allocation11 + $0x364] sm:$0xf]
    %v1831 = vld [vmem:[#allocation11 + $0x368] sm:$0xf]
    %v1832 = vld [vmem:[#allocation11 + $0x36c] sm:$0xf]
    %v1833 = vld [vmem:[#allocation11 + $0x370] sm:$0xf]
    %v1834 = vld [vmem:[#allocation11 + $0x374] sm:$0xf]
    %v1835 = vld [vmem:[#allocation11 + $0x378] sm:$0xf]
    %v1836 = vld [vmem:[#allocation11 + $0x37c] sm:$0xf]
    %v1837 = vld [vmem:[#allocation11 + $0x380] sm:$0xf]
    %v1838 = vld [vmem:[#allocation11 + $0x384] sm:$0xf]
    %v1839 = vld [vmem:[#allocation11 + $0x388] sm:$0xf]
    %v1840 = vld [vmem:[#allocation11 + $0x38c] sm:$0xf]
    %v1841 = vld [vmem:[#allocation11 + $0x390] sm:$0xf]
    %v1842 = vld [vmem:[#allocation11 + $0x394] sm:$0xf]
    %v1843 = vld [vmem:[#allocation11 + $0x398] sm:$0xf]
    %v1844 = vld [vmem:[#allocation11 + $0x39c] sm:$0xf]
    %v1845 = vld [vmem:[#allocation11 + $0x3a0] sm:$0xf]
    %v1846 = vld [vmem:[#allocation11 + $0x3a4] sm:$0xf]
    %v1847 = vld [vmem:[#allocation11 + $0x3a8] sm:$0xf]
    %v1848 = vld [vmem:[#allocation11 + $0x3ac] sm:$0xf]
    %v1849 = vld [vmem:[#allocation11 + $0x3b0] sm:$0xf]
    %v1850 = vld [vmem:[#allocation11 + $0x3b4] sm:$0xf]
    %v1851 = vld [vmem:[#allocation11 + $0x3b8] sm:$0xf]
    %v1852 = vld [vmem:[#allocation11 + $0x3bc] sm:$0xf]
    %v1853 = vld [vmem:[#allocation11 + $0x3c0] sm:$0xf]
    %v1854 = vld [vmem:[#allocation11 + $0x3c4] sm:$0xf]
    %v1855 = vld [vmem:[#allocation11 + $0x3c8] sm:$0xf]
    %v1856 = vld [vmem:[#allocation11 + $0x3cc] sm:$0xf]
    %v1857 = vld [vmem:[#allocation11 + $0x3d0] sm:$0xf]
    %v1858 = vld [vmem:[#allocation11 + $0x3d4] sm:$0xf]
    %v1859 = vld [vmem:[#allocation11 + $0x3d8] sm:$0xf]
    %v1860 = vld [vmem:[#allocation11 + $0x3dc] sm:$0xf]
    %v1861 = vld [vmem:[#allocation11 + $0x3e0] sm:$0xf]
    %v1862 = vld [vmem:[#allocation11 + $0x3e4] sm:$0xf]
    %v1863 = vld [vmem:[#allocation11 + $0x3e8] sm:$0xf]
    %v1864 = vld [vmem:[#allocation11 + $0x3ec] sm:$0xf]
    %v1865 = vld [vmem:[#allocation11 + $0x3f0] sm:$0xf]
    %v1866 = vld [vmem:[#allocation11 + $0x3f4] sm:$0xf]
    %v1867 = vld [vmem:[#allocation11 + $0x3f8] sm:$0xf]
    %v1868 = vld [vmem:[#allocation11 + $0x3fc] sm:$0xf]
    %v1869 = vld [vmem:[%s10] sm:$0x1]
    %v1871 = vlaneseq
    %v1872 = vshrl.u32 %v1871, 7
    %v1873 = vsub.s32 0, %v1872
    %v1874 = vrot.slane %v1869, %v1873
    %v2132 = vunpack.c.l.b16 %v1613
    %v2133 = vunpack.c.l.b16 %v1614
    %v2134 = vunpack.c.l.b16 %v1615
    %v2135 = vunpack.c.l.b16 %v1616
    %v2136 = vunpack.c.l.b16 %v1617
    %v2137 = vunpack.c.l.b16 %v1618
    %v2138 = vunpack.c.l.b16 %v1619
    %v2139 = vunpack.c.l.b16 %v1620
    %v2140 = vunpack.c.l.b16 %v1621
    %v2141 = vunpack.c.l.b16 %v1622
    %v2142 = vunpack.c.l.b16 %v1623
    %v2143 = vunpack.c.l.b16 %v1624
    %v2144 = vunpack.c.l.b16 %v1625
    %v2145 = vunpack.c.l.b16 %v1626
    %v2146 = vunpack.c.l.b16 %v1627
    %v2147 = vunpack.c.l.b16 %v1628
    %v2148 = vunpack.c.l.b16 %v1629
    %v2149 = vunpack.c.l.b16 %v1630
    %v2150 = vunpack.c.l.b16 %v1631
    %v2151 = vunpack.c.l.b16 %v1632
    %v2152 = vunpack.c.l.b16 %v1633
    %v2153 = vunpack.c.l.b16 %v1634
    %v2154 = vunpack.c.l.b16 %v1635
    %v2155 = vunpack.c.l.b16 %v1636
    %v2156 = vunpack.c.l.b16 %v1637
    %v2157 = vunpack.c.l.b16 %v1638
    %v2158 = vunpack.c.l.b16 %v1639
    %v2159 = vunpack.c.l.b16 %v1640
    %v2160 = vunpack.c.l.b16 %v1641
    %v2161 = vunpack.c.l.b16 %v1642
    %v2162 = vunpack.c.l.b16 %v1643
    %v2163 = vunpack.c.l.b16 %v1644
    %v2164 = vunpack.c.l.b16 %v1645
    %v2165 = vunpack.c.l.b16 %v1646
    %v2166 = vunpack.c.l.b16 %v1647
    %v2167 = vunpack.c.l.b16 %v1648
    %v2168 = vunpack.c.l.b16 %v1649
    %v2169 = vunpack.c.l.b16 %v1650
    %v2170 = vunpack.c.l.b16 %v1651
    %v2171 = vunpack.c.l.b16 %v1652
    %v2172 = vunpack.c.l.b16 %v1653
    %v2173 = vunpack.c.l.b16 %v1654
    %v2174 = vunpack.c.l.b16 %v1655
    %v2175 = vunpack.c.l.b16 %v1656
    %v2176 = vunpack.c.l.b16 %v1657
    %v2177 = vunpack.c.l.b16 %v1658
    %v2178 = vunpack.c.l.b16 %v1659
    %v2179 = vunpack.c.l.b16 %v1660
    %v2180 = vunpack.c.l.b16 %v1661
    %v2181 = vunpack.c.l.b16 %v1662
    %v2182 = vunpack.c.l.b16 %v1663
    %v2183 = vunpack.c.l.b16 %v1664
    %v2184 = vunpack.c.l.b16 %v1665
    %v2185 = vunpack.c.l.b16 %v1666
    %v2186 = vunpack.c.l.b16 %v1667
    %v2187 = vunpack.c.l.b16 %v1668
    %v2188 = vunpack.c.l.b16 %v1669
    %v2189 = vunpack.c.l.b16 %v1670
    %v2190 = vunpack.c.l.b16 %v1671
    %v2191 = vunpack.c.l.b16 %v1672
    %v2192 = vunpack.c.l.b16 %v1673
    %v2193 = vunpack.c.l.b16 %v1674
    %v2194 = vunpack.c.l.b16 %v1675
    %v2195 = vunpack.c.l.b16 %v1676
    %v2196 = vunpack.c.l.b16 %v1677
    %v2197 = vunpack.c.l.b16 %v1678
    %v2198 = vunpack.c.l.b16 %v1679
    %v2199 = vunpack.c.l.b16 %v1680
    %v2200 = vunpack.c.l.b16 %v1681
    %v2201 = vunpack.c.l.b16 %v1682
    %v2202 = vunpack.c.l.b16 %v1683
    %v2203 = vunpack.c.l.b16 %v1684
    %v2204 = vunpack.c.l.b16 %v1685
    %v2205 = vunpack.c.l.b16 %v1686
    %v2206 = vunpack.c.l.b16 %v1687
    %v2207 = vunpack.c.l.b16 %v1688
    %v2208 = vunpack.c.l.b16 %v1689
    %v2209 = vunpack.c.l.b16 %v1690
    %v2210 = vunpack.c.l.b16 %v1691
    %v2211 = vunpack.c.l.b16 %v1692
    %v2212 = vunpack.c.l.b16 %v1693
    %v2213 = vunpack.c.l.b16 %v1694
    %v2214 = vunpack.c.l.b16 %v1695
    %v2215 = vunpack.c.l.b16 %v1696
    %v2216 = vunpack.c.l.b16 %v1697
    %v2217 = vunpack.c.l.b16 %v1698
    %v2218 = vunpack.c.l.b16 %v1699
    %v2219 = vunpack.c.l.b16 %v1700
    %v2220 = vunpack.c.l.b16 %v1701
    %v2221 = vunpack.c.l.b16 %v1702
    %v2222 = vunpack.c.l.b16 %v1703
    %v2223 = vunpack.c.l.b16 %v1704
    %v2224 = vunpack.c.l.b16 %v1705
    %v2225 = vunpack.c.l.b16 %v1706
    %v2226 = vunpack.c.l.b16 %v1707
    %v2227 = vunpack.c.l.b16 %v1708
    %v2228 = vunpack.c.l.b16 %v1709
    %v2229 = vunpack.c.l.b16 %v1710
    %v2230 = vunpack.c.l.b16 %v1711
    %v2231 = vunpack.c.l.b16 %v1712
    %v2232 = vunpack.c.l.b16 %v1713
    %v2233 = vunpack.c.l.b16 %v1714
    %v2234 = vunpack.c.l.b16 %v1715
    %v2235 = vunpack.c.l.b16 %v1716
    %v2236 = vunpack.c.l.b16 %v1717
    %v2237 = vunpack.c.l.b16 %v1718
    %v2238 = vunpack.c.l.b16 %v1719
    %v2239 = vunpack.c.l.b16 %v1720
    %v2240 = vunpack.c.l.b16 %v1721
    %v2241 = vunpack.c.l.b16 %v1722
    %v2242 = vunpack.c.l.b16 %v1723
    %v2243 = vunpack.c.l.b16 %v1724
    %v2244 = vunpack.c.l.b16 %v1725
    %v2245 = vunpack.c.l.b16 %v1726
    %v2246 = vunpack.c.l.b16 %v1727
    %v2247 = vunpack.c.l.b16 %v1728
    %v2248 = vunpack.c.l.b16 %v1729
    %v2249 = vunpack.c.l.b16 %v1730
    %v2250 = vunpack.c.l.b16 %v1731
    %v2251 = vunpack.c.l.b16 %v1732
    %v2252 = vunpack.c.l.b16 %v1733
    %v2253 = vunpack.c.l.b16 %v1734
    %v2254 = vunpack.c.l.b16 %v1735
    %v2255 = vunpack.c.l.b16 %v1736
    %v2256 = vunpack.c.l.b16 %v1737
    %v2257 = vunpack.c.l.b16 %v1738
    %v2258 = vunpack.c.l.b16 %v1739
    %v2259 = vunpack.c.l.b16 %v1740
    %v2260 = vunpack.c.l.b16 %v1741
    %v2261 = vunpack.c.l.b16 %v1742
    %v2262 = vunpack.c.l.b16 %v1743
    %v2263 = vunpack.c.l.b16 %v1744
    %v2264 = vunpack.c.l.b16 %v1745
    %v2265 = vunpack.c.l.b16 %v1746
    %v2266 = vunpack.c.l.b16 %v1747
    %v2267 = vunpack.c.l.b16 %v1748
    %v2268 = vunpack.c.l.b16 %v1749
    %v2269 = vunpack.c.l.b16 %v1750
    %v2270 = vunpack.c.l.b16 %v1751
    %v2271 = vunpack.c.l.b16 %v1752
    %v2272 = vunpack.c.l.b16 %v1753
    %v2273 = vunpack.c.l.b16 %v1754
    %v2274 = vunpack.c.l.b16 %v1755
    %v2275 = vunpack.c.l.b16 %v1756
    %v2276 = vunpack.c.l.b16 %v1757
    %v2277 = vunpack.c.l.b16 %v1758
    %v2278 = vunpack.c.l.b16 %v1759
    %v2279 = vunpack.c.l.b16 %v1760
    %v2280 = vunpack.c.l.b16 %v1761
    %v2281 = vunpack.c.l.b16 %v1762
    %v2282 = vunpack.c.l.b16 %v1763
    %v2283 = vunpack.c.l.b16 %v1764
    %v2284 = vunpack.c.l.b16 %v1765
    %v2285 = vunpack.c.l.b16 %v1766
    %v2286 = vunpack.c.l.b16 %v1767
    %v2287 = vunpack.c.l.b16 %v1768
    %v2288 = vunpack.c.l.b16 %v1769
    %v2289 = vunpack.c.l.b16 %v1770
    %v2290 = vunpack.c.l.b16 %v1771
    %v2291 = vunpack.c.l.b16 %v1772
    %v2292 = vunpack.c.l.b16 %v1773
    %v2293 = vunpack.c.l.b16 %v1774
    %v2294 = vunpack.c.l.b16 %v1775
    %v2295 = vunpack.c.l.b16 %v1776
    %v2296 = vunpack.c.l.b16 %v1777
    %v2297 = vunpack.c.l.b16 %v1778
    %v2298 = vunpack.c.l.b16 %v1779
    %v2299 = vunpack.c.l.b16 %v1780
    %v2300 = vunpack.c.l.b16 %v1781
    %v2301 = vunpack.c.l.b16 %v1782
    %v2302 = vunpack.c.l.b16 %v1783
    %v2303 = vunpack.c.l.b16 %v1784
    %v2304 = vunpack.c.l.b16 %v1785
    %v2305 = vunpack.c.l.b16 %v1786
    %v2306 = vunpack.c.l.b16 %v1787
    %v2307 = vunpack.c.l.b16 %v1788
    %v2308 = vunpack.c.l.b16 %v1789
    %v2309 = vunpack.c.l.b16 %v1790
    %v2310 = vunpack.c.l.b16 %v1791
    %v2311 = vunpack.c.l.b16 %v1792
    %v2312 = vunpack.c.l.b16 %v1793
    %v2313 = vunpack.c.l.b16 %v1794
    %v2314 = vunpack.c.l.b16 %v1795
    %v2315 = vunpack.c.l.b16 %v1796
    %v2316 = vunpack.c.l.b16 %v1797
    %v2317 = vunpack.c.l.b16 %v1798
    %v2318 = vunpack.c.l.b16 %v1799
    %v2319 = vunpack.c.l.b16 %v1800
    %v2320 = vunpack.c.l.b16 %v1801
    %v2321 = vunpack.c.l.b16 %v1802
    %v2322 = vunpack.c.l.b16 %v1803
    %v2323 = vunpack.c.l.b16 %v1804
    %v2324 = vunpack.c.l.b16 %v1805
    %v2325 = vunpack.c.l.b16 %v1806
    %v2326 = vunpack.c.l.b16 %v1807
    %v2327 = vunpack.c.l.b16 %v1808
    %v2328 = vunpack.c.l.b16 %v1809
    %v2329 = vunpack.c.l.b16 %v1810
    %v2330 = vunpack.c.l.b16 %v1811
    %v2331 = vunpack.c.l.b16 %v1812
    %v2332 = vunpack.c.l.b16 %v1813
    %v2333 = vunpack.c.l.b16 %v1814
    %v2334 = vunpack.c.l.b16 %v1815
    %v2335 = vunpack.c.l.b16 %v1816
    %v2336 = vunpack.c.l.b16 %v1817
    %v2337 = vunpack.c.l.b16 %v1818
    %v2338 = vunpack.c.l.b16 %v1819
    %v2339 = vunpack.c.l.b16 %v1820
    %v2340 = vunpack.c.l.b16 %v1821
    %v2341 = vunpack.c.l.b16 %v1822
    %v2342 = vunpack.c.l.b16 %v1823
    %v2343 = vunpack.c.l.b16 %v1824
    %v2344 = vunpack.c.l.b16 %v1825
    %v2345 = vunpack.c.l.b16 %v1826
    %v2346 = vunpack.c.l.b16 %v1827
    %v2347 = vunpack.c.l.b16 %v1828
    %v2348 = vunpack.c.l.b16 %v1829
    %v2349 = vunpack.c.l.b16 %v1830
    %v2350 = vunpack.c.l.b16 %v1831
    %v2351 = vunpack.c.l.b16 %v1832
    %v2352 = vunpack.c.l.b16 %v1833
    %v2353 = vunpack.c.l.b16 %v1834
    %v2354 = vunpack.c.l.b16 %v1835
    %v2355 = vunpack.c.l.b16 %v1836
    %v2356 = vunpack.c.l.b16 %v1837
    %v2357 = vunpack.c.l.b16 %v1838
    %v2358 = vunpack.c.l.b16 %v1839
    %v2359 = vunpack.c.l.b16 %v1840
    %v2360 = vunpack.c.l.b16 %v1841
    %v2361 = vunpack.c.l.b16 %v1842
    %v2362 = vunpack.c.l.b16 %v1843
    %v2363 = vunpack.c.l.b16 %v1844
    %v2364 = vunpack.c.l.b16 %v1845
    %v2365 = vunpack.c.l.b16 %v1846
    %v2366 = vunpack.c.l.b16 %v1847
    %v2367 = vunpack.c.l.b16 %v1848
    %v2368 = vunpack.c.l.b16 %v1849
    %v2369 = vunpack.c.l.b16 %v1850
    %v2370 = vunpack.c.l.b16 %v1851
    %v2371 = vunpack.c.l.b16 %v1852
    %v2372 = vunpack.c.l.b16 %v1853
    %v2373 = vunpack.c.l.b16 %v1854
    %v2374 = vunpack.c.l.b16 %v1855
    %v2375 = vunpack.c.l.b16 %v1856
    %v2376 = vunpack.c.l.b16 %v1857
    %v2377 = vunpack.c.l.b16 %v1858
    %v2378 = vunpack.c.l.b16 %v1859
    %v2379 = vunpack.c.l.b16 %v1860
    %v2380 = vunpack.c.l.b16 %v1861
    %v2381 = vunpack.c.l.b16 %v1862
    %v2382 = vunpack.c.l.b16 %v1863
    %v2383 = vunpack.c.l.b16 %v1864
    %v2384 = vunpack.c.l.b16 %v1865
    %v2385 = vunpack.c.l.b16 %v1866
    %v2386 = vunpack.c.l.b16 %v1867
    %v2387 = vunpack.c.l.b16 %v1868
    %v2388 = vpack.c.b16 %v2133, %v2132
    %v2389 = vpack.c.b16 %v2135, %v2134
    %v2390 = vpack.c.b16 %v2137, %v2136
    %v2391 = vpack.c.b16 %v2139, %v2138
    %v2392 = vpack.c.b16 %v2141, %v2140
    %v2393 = vpack.c.b16 %v2143, %v2142
    %v2394 = vpack.c.b16 %v2145, %v2144
    %v2395 = vpack.c.b16 %v2147, %v2146
    %v2396 = vpack.c.b16 %v2149, %v2148
    %v2397 = vpack.c.b16 %v2151, %v2150
    %v2398 = vpack.c.b16 %v2153, %v2152
    %v2399 = vpack.c.b16 %v2155, %v2154
    %v2400 = vpack.c.b16 %v2157, %v2156
    %v2401 = vpack.c.b16 %v2159, %v2158
    %v2402 = vpack.c.b16 %v2161, %v2160
    %v2403 = vpack.c.b16 %v2163, %v2162
    %v2404 = vpack.c.b16 %v2165, %v2164
    %v2405 = vpack.c.b16 %v2167, %v2166
    %v2406 = vpack.c.b16 %v2169, %v2168
    %v2407 = vpack.c.b16 %v2171, %v2170
    %v2408 = vpack.c.b16 %v2173, %v2172
    %v2409 = vpack.c.b16 %v2175, %v2174
    %v2410 = vpack.c.b16 %v2177, %v2176
    %v2411 = vpack.c.b16 %v2179, %v2178
    %v2412 = vpack.c.b16 %v2181, %v2180
    %v2413 = vpack.c.b16 %v2183, %v2182
    %v2414 = vpack.c.b16 %v2185, %v2184
    %v2415 = vpack.c.b16 %v2187, %v2186
    %v2416 = vpack.c.b16 %v2189, %v2188
    %v2417 = vpack.c.b16 %v2191, %v2190
    %v2418 = vpack.c.b16 %v2193, %v2192
    %v2419 = vpack.c.b16 %v2195, %v2194
    %v2420 = vpack.c.b16 %v2197, %v2196
    %v2421 = vpack.c.b16 %v2199, %v2198
    %v2422 = vpack.c.b16 %v2201, %v2200
    %v2423 = vpack.c.b16 %v2203, %v2202
    %v2424 = vpack.c.b16 %v2205, %v2204
    %v2425 = vpack.c.b16 %v2207, %v2206
    %v2426 = vpack.c.b16 %v2209, %v2208
    %v2427 = vpack.c.b16 %v2211, %v2210
    %v2428 = vpack.c.b16 %v2213, %v2212
    %v2429 = vpack.c.b16 %v2215, %v2214
    %v2430 = vpack.c.b16 %v2217, %v2216
    %v2431 = vpack.c.b16 %v2219, %v2218
    %v2432 = vpack.c.b16 %v2221, %v2220
    %v2433 = vpack.c.b16 %v2223, %v2222
    %v2434 = vpack.c.b16 %v2225, %v2224
    %v2435 = vpack.c.b16 %v2227, %v2226
    %v2436 = vpack.c.b16 %v2229, %v2228
    %v2437 = vpack.c.b16 %v2231, %v2230
    %v2438 = vpack.c.b16 %v2233, %v2232
    %v2439 = vpack.c.b16 %v2235, %v2234
    %v2440 = vpack.c.b16 %v2237, %v2236
    %v2441 = vpack.c.b16 %v2239, %v2238
    %v2442 = vpack.c.b16 %v2241, %v2240
    %v2443 = vpack.c.b16 %v2243, %v2242
    %v2444 = vpack.c.b16 %v2245, %v2244
    %v2445 = vpack.c.b16 %v2247, %v2246
    %v2446 = vpack.c.b16 %v2249, %v2248
    %v2447 = vpack.c.b16 %v2251, %v2250
    %v2448 = vpack.c.b16 %v2253, %v2252
    %v2449 = vpack.c.b16 %v2255, %v2254
    %v2450 = vpack.c.b16 %v2257, %v2256
    %v2451 = vpack.c.b16 %v2259, %v2258
    %v2452 = vpack.c.b16 %v2261, %v2260
    %v2453 = vpack.c.b16 %v2263, %v2262
    %v2454 = vpack.c.b16 %v2265, %v2264
    %v2455 = vpack.c.b16 %v2267, %v2266
    %v2456 = vpack.c.b16 %v2269, %v2268
    %v2457 = vpack.c.b16 %v2271, %v2270
    %v2458 = vpack.c.b16 %v2273, %v2272
    %v2459 = vpack.c.b16 %v2275, %v2274
    %v2460 = vpack.c.b16 %v2277, %v2276
    %v2461 = vpack.c.b16 %v2279, %v2278
    %v2462 = vpack.c.b16 %v2281, %v2280
    %v2463 = vpack.c.b16 %v2283, %v2282
    %v2464 = vpack.c.b16 %v2285, %v2284
    %v2465 = vpack.c.b16 %v2287, %v2286
    %v2466 = vpack.c.b16 %v2289, %v2288
    %v2467 = vpack.c.b16 %v2291, %v2290
    %v2468 = vpack.c.b16 %v2293, %v2292
    %v2469 = vpack.c.b16 %v2295, %v2294
    %v2470 = vpack.c.b16 %v2297, %v2296
    %v2471 = vpack.c.b16 %v2299, %v2298
    %v2472 = vpack.c.b16 %v2301, %v2300
    %v2473 = vpack.c.b16 %v2303, %v2302
    %v2474 = vpack.c.b16 %v2305, %v2304
    %v2475 = vpack.c.b16 %v2307, %v2306
    %v2476 = vpack.c.b16 %v2309, %v2308
    %v2477 = vpack.c.b16 %v2311, %v2310
    %v2478 = vpack.c.b16 %v2313, %v2312
    %v2479 = vpack.c.b16 %v2315, %v2314
    %v2480 = vpack.c.b16 %v2317, %v2316
    %v2481 = vpack.c.b16 %v2319, %v2318
    %v2482 = vpack.c.b16 %v2321, %v2320
    %v2483 = vpack.c.b16 %v2323, %v2322
    %v2484 = vpack.c.b16 %v2325, %v2324
    %v2485 = vpack.c.b16 %v2327, %v2326
    %v2486 = vpack.c.b16 %v2329, %v2328
    %v2487 = vpack.c.b16 %v2331, %v2330
    %v2488 = vpack.c.b16 %v2333, %v2332
    %v2489 = vpack.c.b16 %v2335, %v2334
    %v2490 = vpack.c.b16 %v2337, %v2336
    %v2491 = vpack.c.b16 %v2339, %v2338
    %v2492 = vpack.c.b16 %v2341, %v2340
    %v2493 = vpack.c.b16 %v2343, %v2342
    %v2494 = vpack.c.b16 %v2345, %v2344
    %v2495 = vpack.c.b16 %v2347, %v2346
    %v2496 = vpack.c.b16 %v2349, %v2348
    %v2497 = vpack.c.b16 %v2351, %v2350
    %v2498 = vpack.c.b16 %v2353, %v2352
    %v2499 = vpack.c.b16 %v2355, %v2354
    %v2500 = vpack.c.b16 %v2357, %v2356
    %v2501 = vpack.c.b16 %v2359, %v2358
    %v2502 = vpack.c.b16 %v2361, %v2360
    %v2503 = vpack.c.b16 %v2363, %v2362
    %v2504 = vpack.c.b16 %v2365, %v2364
    %v2505 = vpack.c.b16 %v2367, %v2366
    %v2506 = vpack.c.b16 %v2369, %v2368
    %v2507 = vpack.c.b16 %v2371, %v2370
    %v2508 = vpack.c.b16 %v2373, %v2372
    %v2509 = vpack.c.b16 %v2375, %v2374
    %v2510 = vpack.c.b16 %v2377, %v2376
    %v2511 = vpack.c.b16 %v2379, %v2378
    %v2512 = vpack.c.b16 %v2381, %v2380
    %v2513 = vpack.c.b16 %v2383, %v2382
    %v2514 = vpack.c.b16 %v2385, %v2384
    %v2515 = vpack.c.b16 %v2387, %v2386
    %2644 = vmatprep.subr.bf16.mxu0 0
    %2645 = vmatpush1.bf16.msra.mxu0 %v2395
    %2646 = vmatprep.subr.bf16.mxu0 0
    %2647 = vmatpush1.bf16.msra.mxu0 %v2394
    %2648 = vmatprep.subr.bf16.mxu0 0
    %2649 = vmatpush1.bf16.msra.mxu0 %v2393
    %2650 = vmatprep.subr.bf16.mxu0 0
    %2651 = vmatpush1.bf16.msra.mxu0 %v2392
    %2652 = vmatprep.subr.bf16.mxu0 0
    %2653 = vmatpush1.bf16.msra.mxu0 %v2391
    %2654 = vmatprep.subr.bf16.mxu0 0
    %2655 = vmatpush1.bf16.msra.mxu0 %v2390
    %2656 = vmatprep.subr.bf16.mxu0 0
    %2657 = vmatpush1.bf16.msra.mxu0 %v2389
    %2658 = vmatprep.subr.bf16.mxu0 0
    %2659 = vmatpush1.bf16.msra.mxu0 %v2388
    %2660 = vmatprep.subr.bf16.mxu0 0
    %2661 = vmatpush2.bf16.msra.mxu0 %v2403
    %2662 = vmatprep.subr.bf16.mxu0 0
    %2663 = vmatpush2.bf16.msra.mxu0 %v2402
    %2664 = vmatprep.subr.bf16.mxu0 0
    %2665 = vmatpush2.bf16.msra.mxu0 %v2401
    %2666 = vmatprep.subr.bf16.mxu0 0
    %2667 = vmatpush2.bf16.msra.mxu0 %v2400
    %2668 = vmatprep.subr.bf16.mxu0 0
    %2669 = vmatpush2.bf16.msra.mxu0 %v2399
    %2670 = vmatprep.subr.bf16.mxu0 0
    %2671 = vmatpush2.bf16.msra.mxu0 %v2398
    %2672 = vmatprep.subr.bf16.mxu0 0
    %2673 = vmatpush2.bf16.msra.mxu0 %v2397
    %2674 = vmatprep.subr.bf16.mxu0 0
    %2675 = vmatpush2.bf16.msra.mxu0 %v2396
    %2676 = vmatprep.mubr.bf16.mxu0 %v1598
    %2677 = vmatmul.mubr.bf16.gmra.mxu0 %v1597
    %v2678 = vpop.f32.mrf.mxu0
    %v2679 = vadd.f32 %v1874, %v2678
    %v2680 = vpop.f32.mrf.mxu0
    %v2681 = vpop.f32.mrf.mxu0
    %v2682 = vpop.f32.mrf.mxu0
    %2683 = vdwg.mxu0
    %2684 = vmatprep.subr.bf16.mxu0 0
    %2685 = vmatpush1.bf16.msra.mxu0 %v2411
    %2686 = vmatprep.subr.bf16.mxu0 0
    %2687 = vmatpush1.bf16.msra.mxu0 %v2410
    %2688 = vmatprep.subr.bf16.mxu0 0
    %2689 = vmatpush1.bf16.msra.mxu0 %v2409
    %2690 = vmatprep.subr.bf16.mxu0 0
    %2691 = vmatpush1.bf16.msra.mxu0 %v2408
    %2692 = vmatprep.subr.bf16.mxu0 0
    %2693 = vmatpush1.bf16.msra.mxu0 %v2407
    %2694 = vmatprep.subr.bf16.mxu0 0
    %2695 = vmatpush1.bf16.msra.mxu0 %v2406
    %2696 = vmatprep.subr.bf16.mxu0 0
    %2697 = vmatpush1.bf16.msra.mxu0 %v2405
    %2698 = vmatprep.subr.bf16.mxu0 0
    %2699 = vmatpush1.bf16.msra.mxu0 %v2404
    %2700 = vmatprep.subr.bf16.mxu0 0
    %2701 = vmatpush2.bf16.msra.mxu0 %v2419
    %2702 = vmatprep.subr.bf16.mxu0 0
    %2703 = vmatpush2.bf16.msra.mxu0 %v2418
    %2704 = vmatprep.subr.bf16.mxu0 0
    %2705 = vmatpush2.bf16.msra.mxu0 %v2417
    %2706 = vmatprep.subr.bf16.mxu0 0
    %2707 = vmatpush2.bf16.msra.mxu0 %v2416
    %2708 = vmatprep.subr.bf16.mxu0 0
    %2709 = vmatpush2.bf16.msra.mxu0 %v2415
    %2710 = vmatprep.subr.bf16.mxu0 0
    %2711 = vmatpush2.bf16.msra.mxu0 %v2414
    %2712 = vmatprep.subr.bf16.mxu0 0
    %2713 = vmatpush2.bf16.msra.mxu0 %v2413
    %2714 = vmatprep.subr.bf16.mxu0 0
    %2715 = vmatpush2.bf16.msra.mxu0 %v2412
    %2716 = vmatprep.mubr.bf16.mxu0 %v1600
    %2717 = vmatmul.mubr.bf16.gmra.mxu0 %v1599
    %v2718 = vpop.f32.mrf.mxu0
    %v2719 = vadd.f32 %v2679, %v2718
    %v2720 = vpop.f32.mrf.mxu0
    %v2721 = vpop.f32.mrf.mxu0
    %v2722 = vpop.f32.mrf.mxu0
    %2723 = vdwg.mxu0
    %2724 = vmatprep.subr.bf16.mxu0 0
    %2725 = vmatpush1.bf16.msra.mxu0 %v2427
    %2726 = vmatprep.subr.bf16.mxu0 0
    %2727 = vmatpush1.bf16.msra.mxu0 %v2426
    %2728 = vmatprep.subr.bf16.mxu0 0
    %2729 = vmatpush1.bf16.msra.mxu0 %v2425
    %2730 = vmatprep.subr.bf16.mxu0 0
    %2731 = vmatpush1.bf16.msra.mxu0 %v2424
    %2732 = vmatprep.subr.bf16.mxu0 0
    %2733 = vmatpush1.bf16.msra.mxu0 %v2423
    %2734 = vmatprep.subr.bf16.mxu0 0
    %2735 = vmatpush1.bf16.msra.mxu0 %v2422
    %2736 = vmatprep.subr.bf16.mxu0 0
    %2737 = vmatpush1.bf16.msra.mxu0 %v2421
    %2738 = vmatprep.subr.bf16.mxu0 0
    %2739 = vmatpush1.bf16.msra.mxu0 %v2420
    %2740 = vmatprep.subr.bf16.mxu0 0
    %2741 = vmatpush2.bf16.msra.mxu0 %v2435
    %2742 = vmatprep.subr.bf16.mxu0 0
    %2743 = vmatpush2.bf16.msra.mxu0 %v2434
    %2744 = vmatprep.subr.bf16.mxu0 0
    %2745 = vmatpush2.bf16.msra.mxu0 %v2433
    %2746 = vmatprep.subr.bf16.mxu0 0
    %2747 = vmatpush2.bf16.msra.mxu0 %v2432
    %2748 = vmatprep.subr.bf16.mxu0 0
    %2749 = vmatpush2.bf16.msra.mxu0 %v2431
    %2750 = vmatprep.subr.bf16.mxu0 0
    %2751 = vmatpush2.bf16.msra.mxu0 %v2430
    %2752 = vmatprep.subr.bf16.mxu0 0
    %2753 = vmatpush2.bf16.msra.mxu0 %v2429
    %2754 = vmatprep.subr.bf16.mxu0 0
    %2755 = vmatpush2.bf16.msra.mxu0 %v2428
    %2756 = vmatprep.mubr.bf16.mxu0 %v1602
    %2757 = vmatmul.mubr.bf16.gmra.mxu0 %v1601
    %v2758 = vpop.f32.mrf.mxu0
    %v2759 = vadd.f32 %v2719, %v2758
    %v2760 = vpop.f32.mrf.mxu0
    %v2761 = vpop.f32.mrf.mxu0
    %v2762 = vpop.f32.mrf.mxu0
    %2763 = vdwg.mxu0
    %2764 = vmatprep.subr.bf16.mxu0 0
    %2765 = vmatpush1.bf16.msra.mxu0 %v2443
    %2766 = vmatprep.subr.bf16.mxu0 0
    %2767 = vmatpush1.bf16.msra.mxu0 %v2442
    %2768 = vmatprep.subr.bf16.mxu0 0
    %2769 = vmatpush1.bf16.msra.mxu0 %v2441
    %2770 = vmatprep.subr.bf16.mxu0 0
    %2771 = vmatpush1.bf16.msra.mxu0 %v2440
    %2772 = vmatprep.subr.bf16.mxu0 0
    %2773 = vmatpush1.bf16.msra.mxu0 %v2439
    %2774 = vmatprep.subr.bf16.mxu0 0
    %2775 = vmatpush1.bf16.msra.mxu0 %v2438
    %2776 = vmatprep.subr.bf16.mxu0 0
    %2777 = vmatpush1.bf16.msra.mxu0 %v2437
    %2778 = vmatprep.subr.bf16.mxu0 0
    %2779 = vmatpush1.bf16.msra.mxu0 %v2436
    %2780 = vmatprep.subr.bf16.mxu0 0
    %2781 = vmatpush2.bf16.msra.mxu0 %v2451
    %2782 = vmatprep.subr.bf16.mxu0 0
    %2783 = vmatpush2.bf16.msra.mxu0 %v2450
    %2784 = vmatprep.subr.bf16.mxu0 0
    %2785 = vmatpush2.bf16.msra.mxu0 %v2449
    %2786 = vmatprep.subr.bf16.mxu0 0
    %2787 = vmatpush2.bf16.msra.mxu0 %v2448
    %2788 = vmatprep.subr.bf16.mxu0 0
    %2789 = vmatpush2.bf16.msra.mxu0 %v2447
    %2790 = vmatprep.subr.bf16.mxu0 0
    %2791 = vmatpush2.bf16.msra.mxu0 %v2446
    %2792 = vmatprep.subr.bf16.mxu0 0
    %2793 = vmatpush2.bf16.msra.mxu0 %v2445
    %2794 = vmatprep.subr.bf16.mxu0 0
    %2795 = vmatpush2.bf16.msra.mxu0 %v2444
    %2796 = vmatprep.mubr.bf16.mxu0 %v1604
    %2797 = vmatmul.mubr.bf16.gmra.mxu0 %v1603
    %v2798 = vpop.f32.mrf.mxu0
    %v2799 = vadd.f32 %v2759, %v2798
    %v2800 = vpop.f32.mrf.mxu0
    %v2801 = vpop.f32.mrf.mxu0
    %v2802 = vpop.f32.mrf.mxu0
    %2803 = vdwg.mxu0
    %2804 = vmatprep.subr.bf16.mxu0 0
    %2805 = vmatpush1.bf16.msra.mxu0 %v2459
    %2806 = vmatprep.subr.bf16.mxu0 0
    %2807 = vmatpush1.bf16.msra.mxu0 %v2458
    %2808 = vmatprep.subr.bf16.mxu0 0
    %2809 = vmatpush1.bf16.msra.mxu0 %v2457
    %2810 = vmatprep.subr.bf16.mxu0 0
    %2811 = vmatpush1.bf16.msra.mxu0 %v2456
    %2812 = vmatprep.subr.bf16.mxu0 0
    %2813 = vmatpush1.bf16.msra.mxu0 %v2455
    %2814 = vmatprep.subr.bf16.mxu0 0
    %2815 = vmatpush1.bf16.msra.mxu0 %v2454
    %2816 = vmatprep.subr.bf16.mxu0 0
    %2817 = vmatpush1.bf16.msra.mxu0 %v2453
    %2818 = vmatprep.subr.bf16.mxu0 0
    %2819 = vmatpush1.bf16.msra.mxu0 %v2452
    %2820 = vmatprep.subr.bf16.mxu0 0
    %2821 = vmatpush2.bf16.msra.mxu0 %v2467
    %2822 = vmatprep.subr.bf16.mxu0 0
    %2823 = vmatpush2.bf16.msra.mxu0 %v2466
    %2824 = vmatprep.subr.bf16.mxu0 0
    %2825 = vmatpush2.bf16.msra.mxu0 %v2465
    %2826 = vmatprep.subr.bf16.mxu0 0
    %2827 = vmatpush2.bf16.msra.mxu0 %v2464
    %2828 = vmatprep.subr.bf16.mxu0 0
    %2829 = vmatpush2.bf16.msra.mxu0 %v2463
    %2830 = vmatprep.subr.bf16.mxu0 0
    %2831 = vmatpush2.bf16.msra.mxu0 %v2462
    %2832 = vmatprep.subr.bf16.mxu0 0
    %2833 = vmatpush2.bf16.msra.mxu0 %v2461
    %2834 = vmatprep.subr.bf16.mxu0 0
    %2835 = vmatpush2.bf16.msra.mxu0 %v2460
    %2836 = vmatprep.mubr.bf16.mxu0 %v1606
    %2837 = vmatmul.mubr.bf16.gmra.mxu0 %v1605
    %v2838 = vpop.f32.mrf.mxu0
    %v2839 = vadd.f32 %v2799, %v2838
    %v2840 = vpop.f32.mrf.mxu0
    %v2841 = vpop.f32.mrf.mxu0
    %v2842 = vpop.f32.mrf.mxu0
    %2843 = vdwg.mxu0
    %2844 = vmatprep.subr.bf16.mxu0 0
    %2845 = vmatpush1.bf16.msra.mxu0 %v2475
    %2846 = vmatprep.subr.bf16.mxu0 0
    %2847 = vmatpush1.bf16.msra.mxu0 %v2474
    %2848 = vmatprep.subr.bf16.mxu0 0
    %2849 = vmatpush1.bf16.msra.mxu0 %v2473
    %2850 = vmatprep.subr.bf16.mxu0 0
    %2851 = vmatpush1.bf16.msra.mxu0 %v2472
    %2852 = vmatprep.subr.bf16.mxu0 0
    %2853 = vmatpush1.bf16.msra.mxu0 %v2471
    %2854 = vmatprep.subr.bf16.mxu0 0
    %2855 = vmatpush1.bf16.msra.mxu0 %v2470
    %2856 = vmatprep.subr.bf16.mxu0 0
    %2857 = vmatpush1.bf16.msra.mxu0 %v2469
    %2858 = vmatprep.subr.bf16.mxu0 0
    %2859 = vmatpush1.bf16.msra.mxu0 %v2468
    %2860 = vmatprep.subr.bf16.mxu0 0
    %2861 = vmatpush2.bf16.msra.mxu0 %v2483
    %2862 = vmatprep.subr.bf16.mxu0 0
    %2863 = vmatpush2.bf16.msra.mxu0 %v2482
    %2864 = vmatprep.subr.bf16.mxu0 0
    %2865 = vmatpush2.bf16.msra.mxu0 %v2481
    %2866 = vmatprep.subr.bf16.mxu0 0
    %2867 = vmatpush2.bf16.msra.mxu0 %v2480
    %2868 = vmatprep.subr.bf16.mxu0 0
    %2869 = vmatpush2.bf16.msra.mxu0 %v2479
    %2870 = vmatprep.subr.bf16.mxu0 0
    %2871 = vmatpush2.bf16.msra.mxu0 %v2478
    %2872 = vmatprep.subr.bf16.mxu0 0
    %2873 = vmatpush2.bf16.msra.mxu0 %v2477
    %2874 = vmatprep.subr.bf16.mxu0 0
    %2875 = vmatpush2.bf16.msra.mxu0 %v2476
    %2876 = vmatprep.mubr.bf16.mxu0 %v1608
    %2877 = vmatmul.mubr.bf16.gmra.mxu0 %v1607
    %v2878 = vpop.f32.mrf.mxu0
    %v2879 = vadd.f32 %v2839, %v2878
    %v2880 = vpop.f32.mrf.mxu0
    %v2881 = vpop.f32.mrf.mxu0
    %v2882 = vpop.f32.mrf.mxu0
    %2883 = vdwg.mxu0
    %2884 = vmatprep.subr.bf16.mxu0 0
    %2885 = vmatpush1.bf16.msra.mxu0 %v2491
    %2886 = vmatprep.subr.bf16.mxu0 0
    %2887 = vmatpush1.bf16.msra.mxu0 %v2490
    %2888 = vmatprep.subr.bf16.mxu0 0
    %2889 = vmatpush1.bf16.msra.mxu0 %v2489
    %2890 = vmatprep.subr.bf16.mxu0 0
    %2891 = vmatpush1.bf16.msra.mxu0 %v2488
    %2892 = vmatprep.subr.bf16.mxu0 0
    %2893 = vmatpush1.bf16.msra.mxu0 %v2487
    %2894 = vmatprep.subr.bf16.mxu0 0
    %2895 = vmatpush1.bf16.msra.mxu0 %v2486
    %2896 = vmatprep.subr.bf16.mxu0 0
    %2897 = vmatpush1.bf16.msra.mxu0 %v2485
    %2898 = vmatprep.subr.bf16.mxu0 0
    %2899 = vmatpush1.bf16.msra.mxu0 %v2484
    %2900 = vmatprep.subr.bf16.mxu0 0
    %2901 = vmatpush2.bf16.msra.mxu0 %v2499
    %2902 = vmatprep.subr.bf16.mxu0 0
    %2903 = vmatpush2.bf16.msra.mxu0 %v2498
    %2904 = vmatprep.subr.bf16.mxu0 0
    %2905 = vmatpush2.bf16.msra.mxu0 %v2497
    %2906 = vmatprep.subr.bf16.mxu0 0
    %2907 = vmatpush2.bf16.msra.mxu0 %v2496
    %2908 = vmatprep.subr.bf16.mxu0 0
    %2909 = vmatpush2.bf16.msra.mxu0 %v2495
    %2910 = vmatprep.subr.bf16.mxu0 0
    %2911 = vmatpush2.bf16.msra.mxu0 %v2494
    %2912 = vmatprep.subr.bf16.mxu0 0
    %2913 = vmatpush2.bf16.msra.mxu0 %v2493
    %2914 = vmatprep.subr.bf16.mxu0 0
    %2915 = vmatpush2.bf16.msra.mxu0 %v2492
    %2916 = vmatprep.mubr.bf16.mxu0 %v1610
    %2917 = vmatmul.mubr.bf16.gmra.mxu0 %v1609
    %v2918 = vpop.f32.mrf.mxu0
    %v2919 = vadd.f32 %v2879, %v2918
    %v2920 = vpop.f32.mrf.mxu0
    %v2921 = vpop.f32.mrf.mxu0
    %v2922 = vpop.f32.mrf.mxu0
    %2923 = vdwg.mxu0
    %2924 = vmatprep.subr.bf16.mxu0 0
    %2925 = vmatpush1.bf16.msra.mxu0 %v2507
    %2926 = vmatprep.subr.bf16.mxu0 0
    %2927 = vmatpush1.bf16.msra.mxu0 %v2506
    %2928 = vmatprep.subr.bf16.mxu0 0
    %2929 = vmatpush1.bf16.msra.mxu0 %v2505
    %2930 = vmatprep.subr.bf16.mxu0 0
    %2931 = vmatpush1.bf16.msra.mxu0 %v2504
    %2932 = vmatprep.subr.bf16.mxu0 0
    %2933 = vmatpush1.bf16.msra.mxu0 %v2503
    %2934 = vmatprep.subr.bf16.mxu0 0
    %2935 = vmatpush1.bf16.msra.mxu0 %v2502
    %2936 = vmatprep.subr.bf16.mxu0 0
    %2937 = vmatpush1.bf16.msra.mxu0 %v2501
    %2938 = vmatprep.subr.bf16.mxu0 0
    %2939 = vmatpush1.bf16.msra.mxu0 %v2500
    %2940 = vmatprep.subr.bf16.mxu0 0
    %2941 = vmatpush2.bf16.msra.mxu0 %v2515
    %2942 = vmatprep.subr.bf16.mxu0 0
    %2943 = vmatpush2.bf16.msra.mxu0 %v2514
    %2944 = vmatprep.subr.bf16.mxu0 0
    %2945 = vmatpush2.bf16.msra.mxu0 %v2513
    %2946 = vmatprep.subr.bf16.mxu0 0
    %2947 = vmatpush2.bf16.msra.mxu0 %v2512
    %2948 = vmatprep.subr.bf16.mxu0 0
    %2949 = vmatpush2.bf16.msra.mxu0 %v2511
    %2950 = vmatprep.subr.bf16.mxu0 0
    %2951 = vmatpush2.bf16.msra.mxu0 %v2510
    %2952 = vmatprep.subr.bf16.mxu0 0
    %2953 = vmatpush2.bf16.msra.mxu0 %v2509
    %2954 = vmatprep.subr.bf16.mxu0 0
    %2955 = vmatpush2.bf16.msra.mxu0 %v2508
    %2956 = vmatprep.mubr.bf16.mxu0 %v1612
    %2957 = vmatmul.mubr.bf16.gmra.mxu0 %v1611
    %v2958 = vpop.f32.mrf.mxu0
    %v2959 = vadd.f32 %v2919, %v2958
    %v2960 = vpop.f32.mrf.mxu0
    %v2961 = vpop.f32.mrf.mxu0
    %v2962 = vpop.f32.mrf.mxu0
    %2963 = vdwg.mxu0
    %v2964 = vadd.f32 %v399, %v2959
    %v2965 = vld [vmem:[%s11] sm:$0x1]
    %v2966 = vld [vmem:[%s12] sm:$0x1]
    %v2967 = vmul.f32 %v2964, %v145
    %2968 = vadd.xlane.f32.xlu0 %v2967
    %v2969 = vpop.xlane.xlu0 %2968
    %v2970 = vmul.f32 %v2969, 0.01
    %v2971 = vsub.f32 %v2967, %v2970
    %v2972 = vmul.f32 %v2971, %v145
    %v2973 = vmul.f32 %v2972, %v2972
    %2974 = vadd.xlane.f32.xlu0 %v2973
    %v2975 = vpop.xlane.xlu0 %2974
    %v2976 = vmul.f32 %v2975, 0.01
    %v2977 = vadd.f32 %v2976, 1e-05
    %v2978 = vrsqrt.pop %v2977
    %v2979 = vmul.f32 %v2972, %v2978
    %v2981 = vlaneseq
    %v2982 = vshrl.u32 %v2981, 7
    %v2983 = vsub.s32 0, %v2982
    %v2984 = vrot.slane %v2965, %v2983
    %v2986 = vmul.f32 %v2979, %v2984
    %v2988 = vlaneseq
    %v2989 = vshrl.u32 %v2988, 7
    %v2990 = vsub.s32 0, %v2989
    %v2991 = vrot.slane %v2966, %v2990
    %v2993 = vadd.f32 %v2986, %v2991
    %v2994 = vpack.c.bf16 %v2993, %v2993
    %v2995 = vld [vmem:[#allocation13] sm:$0xf]
    %v2996 = vld [vmem:[#allocation13 + $0x4] sm:$0xf]
    %v2997 = vld [vmem:[#allocation13 + $0x8] sm:$0xf]
    %v2998 = vld [vmem:[#allocation13 + $0xc] sm:$0xf]
    %v2999 = vld [vmem:[#allocation13 + $0x10] sm:$0xf]
    %v3000 = vld [vmem:[#allocation13 + $0x14] sm:$0xf]
    %v3001 = vld [vmem:[#allocation13 + $0x18] sm:$0xf]
    %v3002 = vld [vmem:[#allocation13 + $0x1c] sm:$0xf]
    %v3003 = vld [vmem:[#allocation13 + $0x20] sm:$0xf]
    %v3004 = vld [vmem:[#allocation13 + $0x24] sm:$0xf]
    %v3005 = vld [vmem:[#allocation13 + $0x28] sm:$0xf]
    %v3006 = vld [vmem:[#allocation13 + $0x2c] sm:$0xf]
    %v3007 = vld [vmem:[#allocation13 + $0x30] sm:$0xf]
    %v3008 = vld [vmem:[#allocation13 + $0x34] sm:$0xf]
    %v3009 = vld [vmem:[#allocation13 + $0x38] sm:$0xf]
    %v3010 = vld [vmem:[#allocation13 + $0x3c] sm:$0xf]
    %v3027 = vunpack.c.l.b16 %v2995
    %v3028 = vunpack.c.l.b16 %v2996
    %v3029 = vunpack.c.l.b16 %v2997
    %v3030 = vunpack.c.l.b16 %v2998
    %v3031 = vunpack.c.l.b16 %v2999
    %v3032 = vunpack.c.l.b16 %v3000
    %v3033 = vunpack.c.l.b16 %v3001
    %v3034 = vunpack.c.l.b16 %v3002
    %v3035 = vunpack.c.l.b16 %v3003
    %v3036 = vunpack.c.l.b16 %v3004
    %v3037 = vunpack.c.l.b16 %v3005
    %v3038 = vunpack.c.l.b16 %v3006
    %v3039 = vunpack.c.l.b16 %v3007
    %v3040 = vunpack.c.l.b16 %v3008
    %v3041 = vunpack.c.l.b16 %v3009
    %v3042 = vunpack.c.l.b16 %v3010
    %v3043 = vpack.c.b16 %v3028, %v3027
    %v3044 = vpack.c.b16 %v3030, %v3029
    %v3045 = vpack.c.b16 %v3032, %v3031
    %v3046 = vpack.c.b16 %v3034, %v3033
    %v3047 = vpack.c.b16 %v3036, %v3035
    %v3048 = vpack.c.b16 %v3038, %v3037
    %v3049 = vpack.c.b16 %v3040, %v3039
    %v3050 = vpack.c.b16 %v3042, %v3041
    %3059 = vmatprep.subr.bf16.mxu0 0
    %3060 = vmatpush1.bf16.msra.mxu0 %v3050
    %3061 = vmatprep.subr.bf16.mxu0 0
    %3062 = vmatpush1.bf16.msra.mxu0 %v3049
    %3063 = vmatprep.subr.bf16.mxu0 0
    %3064 = vmatpush1.bf16.msra.mxu0 %v3048
    %3065 = vmatprep.subr.bf16.mxu0 0
    %3066 = vmatpush1.bf16.msra.mxu0 %v3047
    %3067 = vmatprep.subr.bf16.mxu0 0
    %3068 = vmatpush1.bf16.msra.mxu0 %v3046
    %3069 = vmatprep.subr.bf16.mxu0 0
    %3070 = vmatpush1.bf16.msra.mxu0 %v3045
    %3071 = vmatprep.subr.bf16.mxu0 0
    %3072 = vmatpush1.bf16.msra.mxu0 %v3044
    %3073 = vmatprep.subr.bf16.mxu0 0
    %3074 = vmatpush1.bf16.msra.mxu0 %v3043
    %3075 = vmatprep.subr.bf16.mxu0 0
    %3076 = vmatpush2.bf16.msra.mxu0 0
    %3077 = vmatprep.subr.bf16.mxu0 0
    %3078 = vmatpush2.bf16.msra.mxu0 0
    %3079 = vmatprep.subr.bf16.mxu0 0
    %3080 = vmatpush2.bf16.msra.mxu0 0
    %3081 = vmatprep.subr.bf16.mxu0 0
    %3082 = vmatpush2.bf16.msra.mxu0 0
    %3083 = vmatprep.subr.bf16.mxu0 0
    %3084 = vmatpush2.bf16.msra.mxu0 0
    %3085 = vmatprep.subr.bf16.mxu0 0
    %3086 = vmatpush2.bf16.msra.mxu0 0
    %3087 = vmatprep.subr.bf16.mxu0 0
    %3088 = vmatpush2.bf16.msra.mxu0 0
    %3089 = vmatprep.subr.bf16.mxu0 0
    %3090 = vmatpush2.bf16.msra.mxu0 0
    %3091 = vmatprep.mubr.bf16.mxu0 0
    %3092 = vmatmul.mubr.bf16.gmra.mxu0 %v2994
    %v3093 = vpop.f32.mrf.mxu0
    %v3094 = vadd.f32 0.0, %v3093
    %v3095 = vpop.f32.mrf.mxu0
    %v3096 = vpop.f32.mrf.mxu0
    %v3097 = vpop.f32.mrf.mxu0
    %3098 = vdwg.mxu0
    %3099 = vst [vmem:[#allocation14] sm:$0xff] %v3094
    // Predicated region
    $region86: #{tpu_custom_call.1} parent=1 // pred_check
      _
    $region87: #{tpu_custom_call.1} parent=1 // pred_check_branch
      %3101 = sbr.rel (0) target = $region89
    $region88: #{tpu_custom_call.1} parent=1 // pred_region
      %s3103 = ssub.s32 128, 128
      %3104 = vsyncadd [#allocation4], %s3103
      %s3106 = sshll.u32 [#allocation14], 4
      %s3107 = int_to_ptr.vmem [resolvable:$true] %s3106
      %3109 = dma.vmem_to_hbm [thread:$0]  %s3107, 128, %s14, [#allocation4]
    $region89: #{tpu_custom_call.1} parent=1 // pred_fallthru
      _
    // Predicated region
    $region90: #{tpu_custom_call.1} parent=1 // pred_check
      _
    $region91: #{tpu_custom_call.1} parent=1 // pred_check_branch
      %3111 = sbr.rel (0) target = $region93
    $region92: #{tpu_custom_call.1} parent=1 // pred_region
      %3112 = dma.done [#allocation4], 128
    $region93: #{tpu_custom_call.1} parent=1 // pred_fallthru
      _
    %3113 = vsyncpa [#allocation3], 1
    %3114 = vsyncpa [#allocation6], 1
    %3115 = vsyncpa [#allocation9], 1
    %3116 = vsyncpa [#allocation12], 1
    %3117 = vsyncpa [#allocation4], 1

</llo_original>
